<compile_context>
chip_gen: v7x
topology: tpu7x:2x2x1
jax: 0.10.0
libtpu: 0.0.40
codegen_flags: <defaults>
</compile_context>

<pallas_src>
import math
import functools

import jax
import jax.numpy as jnp
from jax import lax
from jax.experimental import pallas as pl
from jax.experimental.pallas import tpu as pltpu

# ----------------------------- configuration -------------------------------
B = 2          # batch
T = 8          # sequence length
C = 32         # embed_dim
N_HEAD = 4
HEAD_DIM = C // N_HEAD
HIDDEN = 4 * C
LN_EPS = 1e-5


# ------------------------------- kernel ------------------------------------
def _attention_block_kernel(
    x_ref,          # (B*T, C)
    wqkv_ref,       # (C, 3C)   [Wq | Wk | Wv]
    wp_ref,         # (C, C)
    w1_ref,         # (C, 4C)
    w2_ref,         # (4C, C)
    vec_ref,        # (6, C)    rows: ln1_g, ln1_b, ln2_g, ln2_b, b_proj, b2
    bwide_ref,      # (2, 4C)   row0: b1, row1: [bq | bk | bv | 0]
    out_ref,        # (B*T, C)
    *, batch, seq_len, n_head, head_dim,
):
    c = n_head * head_dim
    bt = batch * seq_len

    x = x_ref[...]                                   # (BT, C) float32

    ln1_g = vec_ref[0:1, :]
    ln1_b = vec_ref[1:2, :]
    ln2_g = vec_ref[2:3, :]
    ln2_b = vec_ref[3:4, :]
    b_proj = vec_ref[4:5, :]
    b2 = vec_ref[5:6, :]
    b1 = bwide_ref[0:1, :]
    bqkv = bwide_ref[1:2, 0:3 * c]

    def layernorm(h, g, b):
        mu = jnp.mean(h, axis=-1, keepdims=True)
        var = jnp.mean((h - mu) * (h - mu), axis=-1, keepdims=True)
        return (h - mu) * lax.rsqrt(var + LN_EPS) * g + b

    # ---- LN1 + fused QKV projection (single MXU matmul over all rows) ----
    h = layernorm(x, ln1_g, ln1_b)
    qkv = jnp.dot(h, wqkv_ref[...],
                  preferred_element_type=jnp.float32) + bqkv       # (BT, 3C)

    # Fold the 1/sqrt(head_dim) attention scale into Q once.
    scale = 1.0 / math.sqrt(head_dim)
    q = qkv[:, 0:c] * scale
    k = qkv[:, c:2 * c]
    v = qkv[:, 2 * c:3 * c]

    # ---- block-diagonal causal mask over flattened batch*time rows ----
    rows = lax.broadcasted_iota(jnp.int32, (bt, bt), 0)
    cols = lax.broadcasted_iota(jnp.int32, (bt, bt), 1)
    mask = rows >= cols                               # causal within the slab
    for bidx in range(1, batch):                      # forbid crossing batches
        m = bidx * seq_len
        mask = jnp.logical_and(mask, jnp.logical_or(cols >= m, rows < m))
    neg = jnp.float32(-1e30)       # finite sentinel; avoids -inf NaN hazards

    # Contract the last dims of q and k: q @ k^T without an XLU transpose.
    trans_b_dims = (((1,), (1,)), ((), ()))

    # ---- per-head attention, accumulated through the output projection ----
    y = None
    for hd in range(n_head):
        sl = slice(hd * head_dim, (hd + 1) * head_dim)
        att = lax.dot_general(q[:, sl], k[:, sl], trans_b_dims,
                              preferred_element_type=jnp.float32)  # (BT, BT)
        att = jnp.where(mask, att, neg)
        att = jnp.exp(att - jnp.max(att, axis=-1, keepdims=True))
        att = att * pl.reciprocal(jnp.sum(att, axis=-1, keepdims=True),
                                  approx=True)
        h_out = jnp.dot(att, v[:, sl],
                        preferred_element_type=jnp.float32)        # (BT, Dh)
        contrib = jnp.dot(h_out, wp_ref[sl, :],
                          preferred_element_type=jnp.float32)      # (BT, C)
        y = contrib if y is None else y + contrib

    x1 = x + y + b_proj                                            # residual 1

    # ---- LN2 + MLP (Linear -> GELU v2 -> Linear) + residual ----
    h2 = layernorm(x1, ln2_g, ln2_b)
    m1 = jnp.dot(h2, w1_ref[...], preferred_element_type=jnp.float32) + b1
    m1 = m1 * jax.nn.sigmoid(1.702 * m1)                           # GELU 'v2'
    m2 = jnp.dot(m1, w2_ref[...], preferred_element_type=jnp.float32) + b2

    out_ref[...] = x1 + m2
    # TODO(synk): cached_forward / past_kv path and the returned attention
    # matrix (unused by AttentionBlock.forward) are not implemented.


# ------------------------------- wrapper ------------------------------------
def attention_block_forward(x, packed):
    """x: (B, T, C) float32.  packed: dict from pack_params()."""
    b, t, c = x.shape
    bt = b * t
    hidden = 4 * c
    x2 = x.reshape(bt, c)                 # lane-minimum (B*T, C) slab

    kernel = functools.partial(
        _attention_block_kernel,
        batch=b, seq_len=t, n_head=N_HEAD, head_dim=c // N_HEAD)

    def full(shape):
        return pl.BlockSpec(shape, lambda i: (0,) * len(shape))

    out2 = pl.pallas_call(
        kernel,
        out_shape=jax.ShapeDtypeStruct((bt, c), jnp.float32),
        grid=(1,),                        # single step: amortize all overhead
        in_specs=[
            full((bt, c)),                # x
            full((c, 3 * c)),             # fused Wqkv
            full((c, c)),                 # Wproj
            full((c, hidden)),            # W1
            full((hidden, c)),            # W2
            full((6, c)),                 # stacked LN params / narrow biases
            full((2, hidden)),            # [b1 ; bqkv|0]
        ],
        out_specs=full((bt, c)),
        compiler_params=pltpu.CompilerParams(
            dimension_semantics=("arbitrary",)),
    )(x2, packed["wqkv"], packed["wp"], packed["w1"], packed["w2"],
      packed["vec"], packed["bwide"])

    return out2.reshape(b, t, c)


# -------------------- parameter init / packing (one-time) -------------------
def init_params(key, c):
    hidden = 4 * c
    ks = jax.random.split(key, 12)
    u = lambda k, shape, fan_in: jax.random.uniform(
        k, shape, jnp.float32, -1.0 / math.sqrt(fan_in), 1.0 / math.sqrt(fan_in))
    return {
        "ln1_g": jnp.ones((1, c), jnp.float32),
        "ln1_b": jnp.zeros((1, c), jnp.float32),
        "ln2_g": jnp.ones((1, c), jnp.float32),
        "ln2_b": jnp.zeros((1, c), jnp.float32),
        # Linear weights stored as (in, out) so kernel computes x @ W + b.
        "wq": u(ks[0], (c, c), c), "bq": u(ks[1], (1, c), c),
        "wk": u(ks[2], (c, c), c), "bk": u(ks[3], (1, c), c),
        "wv": u(ks[4], (c, c), c), "bv": u(ks[5], (1, c), c),
        "wp": u(ks[6], (c, c), c), "bp": u(ks[7], (1, c), c),
        "w1": u(ks[8], (c, hidden), c), "b1": u(ks[9], (1, hidden), c),
        "w2": u(ks[10], (hidden, c), hidden), "b2": u(ks[11], (1, c), hidden),
    }


def pack_params(p):
    c = p["wq"].shape[0]
    return {
        "wqkv": jnp.concatenate([p["wq"], p["wk"], p["wv"]], axis=1),   # (C,3C)
        "wp": p["wp"],
        "w1": p["w1"],
        "w2": p["w2"],
        "vec": jnp.concatenate(
            [p["ln1_g"], p["ln1_b"], p["ln2_g"], p["ln2_b"],
             p["bp"], p["b2"]], axis=0),                                # (6,C)
        "bwide": jnp.concatenate(
            [p["b1"],
             jnp.concatenate([p["bq"], p["bk"], p["bv"],
                              jnp.zeros((1, c), jnp.float32)], axis=1)],
            axis=0),                                                    # (2,4C)
    }


# --------------------------- pure-JAX reference ------------------------------
def reference_forward(x, p):
    def ln(h, g, b):
        mu = jnp.mean(h, axis=-1, keepdims=True)
        var = jnp.mean((h - mu) ** 2, axis=-1, keepdims=True)
        return (h - mu) / jnp.sqrt(var + LN_EPS) * g + b

    bsz, t, c = x.shape
    h = ln(x, p["ln1_g"], p["ln1_b"])
    q = h @ p["wq"] + p["bq"]
    k = h @ p["wk"] + p["bk"]
    v = h @ p["wv"] + p["bv"]
    q = q.reshape(bsz, t, N_HEAD, HEAD_DIM).transpose(0, 2, 1, 3)
    k = k.reshape(bsz, t, N_HEAD, HEAD_DIM).transpose(0, 2, 1, 3)
    v = v.reshape(bsz, t, N_HEAD, HEAD_DIM).transpose(0, 2, 1, 3)
    att = jnp.einsum("bhqd,bhkd->bhqk", q, k) / math.sqrt(HEAD_DIM)
    mask = jnp.tril(jnp.ones((t, t), bool))
    att = jnp.where(mask, att, -jnp.inf)
    att = jax.nn.softmax(att, axis=-1)
    y = jnp.einsum("bhqk,bhkd->bhqd", att, v)
    y = y.transpose(0, 2, 1, 3).reshape(bsz, t, c)
    y = y @ p["wp"] + p["bp"]
    x1 = x + y
    h2 = ln(x1, p["ln2_g"], p["ln2_b"])
    m = h2 @ p["w1"] + p["b1"]
    m = m * jax.nn.sigmoid(1.702 * m)
    m = m @ p["w2"] + p["b2"]
    return x1 + m


# --------------------------------- main --------------------------------------
if __name__ == "__main__":
    key = jax.random.PRNGKey(0)
    kx, kp = jax.random.split(key)
    x = jax.random.normal(kx, (B, T, C), jnp.float32)
    params = init_params(kp, C)
    packed = pack_params(params)

    out = attention_block_forward(x, packed)
    out = jax.block_until_ready(out)

    ref = jax.block_until_ready(reference_forward(x, params))
    assert out.shape == (B, T, C)
    assert jnp.allclose(out, ref, atol=2e-2, rtol=2e-2), (
        f"max abs err {jnp.max(jnp.abs(out - ref))}")

    print("KERNEL_OK")
</pallas_src>

<mosaic_0001>
module attributes {stable_mosaic.version = 11 : i64} {
  func.func @_attention_block_kernel(%arg0: i32, %arg1: memref<16x32xf32, #tpu.memory_space<vmem>>, %arg2: memref<32x96xf32, #tpu.memory_space<vmem>>, %arg3: memref<32x32xf32, #tpu.memory_space<vmem>>, %arg4: memref<32x128xf32, #tpu.memory_space<vmem>>, %arg5: memref<128x32xf32, #tpu.memory_space<vmem>>, %arg6: memref<6x32xf32, #tpu.memory_space<vmem>>, %arg7: memref<2x128xf32, #tpu.memory_space<vmem>>, %arg8: memref<16x32xf32, #tpu.memory_space<vmem>>) attributes {dimension_semantics = [#tpu.dimension_semantics<arbitrary>], iteration_bounds = array<i64: 1>, scalar_prefetch = 0 : i64, scratch_operands = 0 : i64, tpu.core_type = #tpu.core_type<tc>, window_params = [{pipeline_mode = #tpu.pipeline_mode<synchronous>, transform_indices = @transform_0, window_bounds = array<i64: 16, 32>}, {pipeline_mode = #tpu.pipeline_mode<synchronous>, transform_indices = @transform_1, window_bounds = array<i64: 32, 96>}, {pipeline_mode = #tpu.pipeline_mode<synchronous>, transform_indices = @transform_2, window_bounds = array<i64: 32, 32>}, {pipeline_mode = #tpu.pipeline_mode<synchronous>, transform_indices = @transform_3, window_bounds = array<i64: 32, 128>}, {pipeline_mode = #tpu.pipeline_mode<synchronous>, transform_indices = @transform_4, window_bounds = array<i64: 128, 32>}, {pipeline_mode = #tpu.pipeline_mode<synchronous>, transform_indices = @transform_5, window_bounds = array<i64: 6, 32>}, {pipeline_mode = #tpu.pipeline_mode<synchronous>, transform_indices = @transform_6, window_bounds = array<i64: 2, 128>}, {pipeline_mode = #tpu.pipeline_mode<synchronous>, transform_indices = @transform_7, window_bounds = array<i64: 16, 32>}]} {
    %c0 = arith.constant 0 : index
    %c0_0 = arith.constant 0 : index
    %0 = vector.load %arg1[%c0, %c0_0] : memref<16x32xf32, #tpu.memory_space<vmem>>, vector<16x32xf32>
    %c0_1 = arith.constant 0 : index
    %c0_2 = arith.constant 0 : index
    %1 = vector.load %arg6[%c0_1, %c0_2] : memref<6x32xf32, #tpu.memory_space<vmem>>, vector<1x32xf32>
    %c1 = arith.constant 1 : index
    %c0_3 = arith.constant 0 : index
    %2 = vector.load %arg6[%c1, %c0_3] : memref<6x32xf32, #tpu.memory_space<vmem>>, vector<1x32xf32>
    %c2 = arith.constant 2 : index
    %c0_4 = arith.constant 0 : index
    %3 = vector.load %arg6[%c2, %c0_4] : memref<6x32xf32, #tpu.memory_space<vmem>>, vector<1x32xf32>
    %c3 = arith.constant 3 : index
    %c0_5 = arith.constant 0 : index
    %4 = vector.load %arg6[%c3, %c0_5] : memref<6x32xf32, #tpu.memory_space<vmem>>, vector<1x32xf32>
    %c4 = arith.constant 4 : index
    %c0_6 = arith.constant 0 : index
    %5 = vector.load %arg6[%c4, %c0_6] : memref<6x32xf32, #tpu.memory_space<vmem>>, vector<1x32xf32>
    %c5 = arith.constant 5 : index
    %c0_7 = arith.constant 0 : index
    %6 = vector.load %arg6[%c5, %c0_7] : memref<6x32xf32, #tpu.memory_space<vmem>>, vector<1x32xf32>
    %c0_8 = arith.constant 0 : index
    %c0_9 = arith.constant 0 : index
    %7 = vector.load %arg7[%c0_8, %c0_9] : memref<2x128xf32, #tpu.memory_space<vmem>>, vector<1x128xf32>
    %c1_10 = arith.constant 1 : index
    %c0_11 = arith.constant 0 : index
    %8 = vector.load %arg7[%c1_10, %c0_11] : memref<2x128xf32, #tpu.memory_space<vmem>>, vector<1x96xf32>
    %cst = arith.constant dense<0.000000e+00> : vector<16xf32>
    %9 = vector.multi_reduction <add>, %0, %cst [1] : vector<16x32xf32> to vector<16xf32>
    %10 = vector.shape_cast %9 : vector<16xf32> to vector<16x1xf32>
    %cst_12 = arith.constant 3.200000e+01 : f32
    %11 = vector.broadcast %cst_12 : f32 to vector<16x1xf32>
    %12 = arith.divf %10, %11 : vector<16x1xf32>
    %13 = vector.broadcast %12 : vector<16x1xf32> to vector<16x32xf32>
    %14 = arith.subf %0, %13 : vector<16x32xf32>
    %15 = vector.broadcast %12 : vector<16x1xf32> to vector<16x32xf32>
    %16 = arith.subf %0, %15 : vector<16x32xf32>
    %17 = arith.mulf %14, %16 : vector<16x32xf32>
    %cst_13 = arith.constant dense<0.000000e+00> : vector<16xf32>
    %18 = vector.multi_reduction <add>, %17, %cst_13 [1] : vector<16x32xf32> to vector<16xf32>
    %19 = vector.shape_cast %18 : vector<16xf32> to vector<16x1xf32>
    %cst_14 = arith.constant 3.200000e+01 : f32
    %20 = vector.broadcast %cst_14 : f32 to vector<16x1xf32>
    %21 = arith.divf %19, %20 : vector<16x1xf32>
    %22 = vector.broadcast %12 : vector<16x1xf32> to vector<16x32xf32>
    %23 = arith.subf %0, %22 : vector<16x32xf32>
    %cst_15 = arith.constant 9.99999974E-6 : f32
    %24 = vector.broadcast %cst_15 : f32 to vector<16x1xf32>
    %25 = arith.addf %21, %24 : vector<16x1xf32>
    %26 = math.rsqrt %25 : vector<16x1xf32>
    %27 = vector.broadcast %26 : vector<16x1xf32> to vector<16x32xf32>
    %28 = arith.mulf %23, %27 : vector<16x32xf32>
    %29 = vector.broadcast %1 : vector<1x32xf32> to vector<16x32xf32>
    %30 = arith.mulf %28, %29 : vector<16x32xf32>
    %31 = vector.broadcast %2 : vector<1x32xf32> to vector<16x32xf32>
    %32 = arith.addf %30, %31 : vector<16x32xf32>
    %c0_16 = arith.constant 0 : index
    %c0_17 = arith.constant 0 : index
    %33 = vector.load %arg2[%c0_16, %c0_17] : memref<32x96xf32, #tpu.memory_space<vmem>>, vector<32x96xf32>
    %cst_18 = arith.constant dense<0.000000e+00> : vector<16x96xf32>
    %34 = tpu.matmul %32, %33, %cst_18 {dimension_numbers = #tpu.dot_dimension_numbers<[1], [0], [0], [1], [0, 0, 1, 1], [], []>} : vector<16x32xf32>, vector<32x96xf32>, vector<16x96xf32> -> vector<16x96xf32>
    %35 = vector.broadcast %8 : vector<1x96xf32> to vector<16x96xf32>
    %36 = arith.addf %34, %35 : vector<16x96xf32>
    %37 = vector.extract_strided_slice %36 {offsets = [0, 0], sizes = [16, 32], strides = [1, 1]} : vector<16x96xf32> to vector<16x32xf32>
    %cst_19 = arith.constant 0.353553385 : f32
    %38 = vector.broadcast %cst_19 : f32 to vector<16x32xf32>
    %39 = arith.mulf %37, %38 : vector<16x32xf32>
    %40 = vector.extract_strided_slice %36 {offsets = [0, 32], sizes = [16, 32], strides = [1, 1]} : vector<16x96xf32> to vector<16x32xf32>
    %41 = vector.extract_strided_slice %36 {offsets = [0, 64], sizes = [16, 32], strides = [1, 1]} : vector<16x96xf32> to vector<16x32xf32>
    %42 = tpu.iota {dimensions = array<i32: 0>} : vector<16x16xi32>
    %43 = tpu.iota {dimensions = array<i32: 1>} : vector<16x16xi32>
    %44 = arith.cmpi sge, %42, %43 : vector<16x16xi32>
    %c8_i32 = arith.constant 8 : i32
    %45 = vector.broadcast %c8_i32 : i32 to vector<16x16xi32>
    %46 = arith.cmpi sge, %43, %45 : vector<16x16xi32>
    %c8_i32_20 = arith.constant 8 : i32
    %47 = vector.broadcast %c8_i32_20 : i32 to vector<16x16xi32>
    %48 = arith.cmpi slt, %42, %47 : vector<16x16xi32>
    %49 = arith.ori %46, %48 : vector<16x16xi1>
    %50 = arith.andi %44, %49 : vector<16x16xi1>
    %51 = vector.extract_strided_slice %39 {offsets = [0, 0], sizes = [16, 8], strides = [1, 1]} : vector<16x32xf32> to vector<16x8xf32>
    %52 = vector.extract_strided_slice %40 {offsets = [0, 0], sizes = [16, 8], strides = [1, 1]} : vector<16x32xf32> to vector<16x8xf32>
    %cst_21 = arith.constant dense<0.000000e+00> : vector<16x16xf32>
    %53 = tpu.matmul %51, %52, %cst_21 {dimension_numbers = #tpu.dot_dimension_numbers<[1], [1], [0], [0], [0, 0, 1, 0], [], []>} : vector<16x8xf32>, vector<16x8xf32>, vector<16x16xf32> -> vector<16x16xf32>
    %cst_22 = arith.constant -1.000000e+30 : f32
    %54 = vector.broadcast %cst_22 : f32 to vector<16x16xf32>
    %55 = arith.select %50, %53, %54 : vector<16x16xi1>, vector<16x16xf32>
    %cst_23 = arith.constant dense<0xFF800000> : vector<16xf32>
    %56 = vector.multi_reduction <maximumf>, %55, %cst_23 [1] : vector<16x16xf32> to vector<16xf32>
    %57 = vector.shape_cast %56 : vector<16xf32> to vector<16x1xf32>
    %58 = vector.broadcast %57 : vector<16x1xf32> to vector<16x16xf32>
    %59 = arith.subf %55, %58 : vector<16x16xf32>
    %60 = math.exp %59 : vector<16x16xf32>
    %cst_24 = arith.constant dense<0.000000e+00> : vector<16xf32>
    %61 = vector.multi_reduction <add>, %60, %cst_24 [1] : vector<16x16xf32> to vector<16xf32>
    %62 = vector.shape_cast %61 : vector<16xf32> to vector<16x1xf32>
    %63 = tpu.reciprocal %62 {approx = true} : vector<16x1xf32> -> vector<16x1xf32>
    %64 = vector.broadcast %63 : vector<16x1xf32> to vector<16x16xf32>
    %65 = arith.mulf %60, %64 : vector<16x16xf32>
    %66 = vector.extract_strided_slice %41 {offsets = [0, 0], sizes = [16, 8], strides = [1, 1]} : vector<16x32xf32> to vector<16x8xf32>
    %cst_25 = arith.constant dense<0.000000e+00> : vector<16x8xf32>
    %67 = tpu.matmul %65, %66, %cst_25 {dimension_numbers = #tpu.dot_dimension_numbers<[1], [0], [0], [1], [0, 0, 1, 1], [], []>} : vector<16x16xf32>, vector<16x8xf32>, vector<16x8xf32> -> vector<16x8xf32>
    %c0_26 = arith.constant 0 : index
    %c0_27 = arith.constant 0 : index
    %68 = vector.load %arg3[%c0_26, %c0_27] : memref<32x32xf32, #tpu.memory_space<vmem>>, vector<8x32xf32>
    %cst_28 = arith.constant dense<0.000000e+00> : vector<16x32xf32>
    %69 = tpu.matmul %67, %68, %cst_28 {dimension_numbers = #tpu.dot_dimension_numbers<[1], [0], [0], [1], [0, 0, 1, 1], [], []>} : vector<16x8xf32>, vector<8x32xf32>, vector<16x32xf32> -> vector<16x32xf32>
    %70 = vector.extract_strided_slice %39 {offsets = [0, 8], sizes = [16, 8], strides = [1, 1]} : vector<16x32xf32> to vector<16x8xf32>
    %71 = vector.extract_strided_slice %40 {offsets = [0, 8], sizes = [16, 8], strides = [1, 1]} : vector<16x32xf32> to vector<16x8xf32>
    %cst_29 = arith.constant dense<0.000000e+00> : vector<16x16xf32>
    %72 = tpu.matmul %70, %71, %cst_29 {dimension_numbers = #tpu.dot_dimension_numbers<[1], [1], [0], [0], [0, 0, 1, 0], [], []>} : vector<16x8xf32>, vector<16x8xf32>, vector<16x16xf32> -> vector<16x16xf32>
    %cst_30 = arith.constant -1.000000e+30 : f32
    %73 = vector.broadcast %cst_30 : f32 to vector<16x16xf32>
    %74 = arith.select %50, %72, %73 : vector<16x16xi1>, vector<16x16xf32>
    %cst_31 = arith.constant dense<0xFF800000> : vector<16xf32>
    %75 = vector.multi_reduction <maximumf>, %74, %cst_31 [1] : vector<16x16xf32> to vector<16xf32>
    %76 = vector.shape_cast %75 : vector<16xf32> to vector<16x1xf32>
    %77 = vector.broadcast %76 : vector<16x1xf32> to vector<16x16xf32>
    %78 = arith.subf %74, %77 : vector<16x16xf32>
    %79 = math.exp %78 : vector<16x16xf32>
    %cst_32 = arith.constant dense<0.000000e+00> : vector<16xf32>
    %80 = vector.multi_reduction <add>, %79, %cst_32 [1] : vector<16x16xf32> to vector<16xf32>
    %81 = vector.shape_cast %80 : vector<16xf32> to vector<16x1xf32>
    %82 = tpu.reciprocal %81 {approx = true} : vector<16x1xf32> -> vector<16x1xf32>
    %83 = vector.broadcast %82 : vector<16x1xf32> to vector<16x16xf32>
    %84 = arith.mulf %79, %83 : vector<16x16xf32>
    %85 = vector.extract_strided_slice %41 {offsets = [0, 8], sizes = [16, 8], strides = [1, 1]} : vector<16x32xf32> to vector<16x8xf32>
    %cst_33 = arith.constant dense<0.000000e+00> : vector<16x8xf32>
    %86 = tpu.matmul %84, %85, %cst_33 {dimension_numbers = #tpu.dot_dimension_numbers<[1], [0], [0], [1], [0, 0, 1, 1], [], []>} : vector<16x16xf32>, vector<16x8xf32>, vector<16x8xf32> -> vector<16x8xf32>
    %c8 = arith.constant 8 : index
    %c0_34 = arith.constant 0 : index
    %87 = vector.load %arg3[%c8, %c0_34] : memref<32x32xf32, #tpu.memory_space<vmem>>, vector<8x32xf32>
    %cst_35 = arith.constant dense<0.000000e+00> : vector<16x32xf32>
    %88 = tpu.matmul %86, %87, %cst_35 {dimension_numbers = #tpu.dot_dimension_numbers<[1], [0], [0], [1], [0, 0, 1, 1], [], []>} : vector<16x8xf32>, vector<8x32xf32>, vector<16x32xf32> -> vector<16x32xf32>
    %89 = arith.addf %69, %88 : vector<16x32xf32>
    %90 = vector.extract_strided_slice %39 {offsets = [0, 16], sizes = [16, 8], strides = [1, 1]} : vector<16x32xf32> to vector<16x8xf32>
    %91 = vector.extract_strided_slice %40 {offsets = [0, 16], sizes = [16, 8], strides = [1, 1]} : vector<16x32xf32> to vector<16x8xf32>
    %cst_36 = arith.constant dense<0.000000e+00> : vector<16x16xf32>
    %92 = tpu.matmul %90, %91, %cst_36 {dimension_numbers = #tpu.dot_dimension_numbers<[1], [1], [0], [0], [0, 0, 1, 0], [], []>} : vector<16x8xf32>, vector<16x8xf32>, vector<16x16xf32> -> vector<16x16xf32>
    %cst_37 = arith.constant -1.000000e+30 : f32
    %93 = vector.broadcast %cst_37 : f32 to vector<16x16xf32>
    %94 = arith.select %50, %92, %93 : vector<16x16xi1>, vector<16x16xf32>
    %cst_38 = arith.constant dense<0xFF800000> : vector<16xf32>
    %95 = vector.multi_reduction <maximumf>, %94, %cst_38 [1] : vector<16x16xf32> to vector<16xf32>
    %96 = vector.shape_cast %95 : vector<16xf32> to vector<16x1xf32>
    %97 = vector.broadcast %96 : vector<16x1xf32> to vector<16x16xf32>
    %98 = arith.subf %94, %97 : vector<16x16xf32>
    %99 = math.exp %98 : vector<16x16xf32>
    %cst_39 = arith.constant dense<0.000000e+00> : vector<16xf32>
    %100 = vector.multi_reduction <add>, %99, %cst_39 [1] : vector<16x16xf32> to vector<16xf32>
    %101 = vector.shape_cast %100 : vector<16xf32> to vector<16x1xf32>
    %102 = tpu.reciprocal %101 {approx = true} : vector<16x1xf32> -> vector<16x1xf32>
    %103 = vector.broadcast %102 : vector<16x1xf32> to vector<16x16xf32>
    %104 = arith.mulf %99, %103 : vector<16x16xf32>
    %105 = vector.extract_strided_slice %41 {offsets = [0, 16], sizes = [16, 8], strides = [1, 1]} : vector<16x32xf32> to vector<16x8xf32>
    %cst_40 = arith.constant dense<0.000000e+00> : vector<16x8xf32>
    %106 = tpu.matmul %104, %105, %cst_40 {dimension_numbers = #tpu.dot_dimension_numbers<[1], [0], [0], [1], [0, 0, 1, 1], [], []>} : vector<16x16xf32>, vector<16x8xf32>, vector<16x8xf32> -> vector<16x8xf32>
    %c16 = arith.constant 16 : index
    %c0_41 = arith.constant 0 : index
    %107 = vector.load %arg3[%c16, %c0_41] : memref<32x32xf32, #tpu.memory_space<vmem>>, vector<8x32xf32>
    %cst_42 = arith.constant dense<0.000000e+00> : vector<16x32xf32>
    %108 = tpu.matmul %106, %107, %cst_42 {dimension_numbers = #tpu.dot_dimension_numbers<[1], [0], [0], [1], [0, 0, 1, 1], [], []>} : vector<16x8xf32>, vector<8x32xf32>, vector<16x32xf32> -> vector<16x32xf32>
    %109 = arith.addf %89, %108 : vector<16x32xf32>
    %110 = vector.extract_strided_slice %39 {offsets = [0, 24], sizes = [16, 8], strides = [1, 1]} : vector<16x32xf32> to vector<16x8xf32>
    %111 = vector.extract_strided_slice %40 {offsets = [0, 24], sizes = [16, 8], strides = [1, 1]} : vector<16x32xf32> to vector<16x8xf32>
    %cst_43 = arith.constant dense<0.000000e+00> : vector<16x16xf32>
    %112 = tpu.matmul %110, %111, %cst_43 {dimension_numbers = #tpu.dot_dimension_numbers<[1], [1], [0], [0], [0, 0, 1, 0], [], []>} : vector<16x8xf32>, vector<16x8xf32>, vector<16x16xf32> -> vector<16x16xf32>
    %cst_44 = arith.constant -1.000000e+30 : f32
    %113 = vector.broadcast %cst_44 : f32 to vector<16x16xf32>
    %114 = arith.select %50, %112, %113 : vector<16x16xi1>, vector<16x16xf32>
    %cst_45 = arith.constant dense<0xFF800000> : vector<16xf32>
    %115 = vector.multi_reduction <maximumf>, %114, %cst_45 [1] : vector<16x16xf32> to vector<16xf32>
    %116 = vector.shape_cast %115 : vector<16xf32> to vector<16x1xf32>
    %117 = vector.broadcast %116 : vector<16x1xf32> to vector<16x16xf32>
    %118 = arith.subf %114, %117 : vector<16x16xf32>
    %119 = math.exp %118 : vector<16x16xf32>
    %cst_46 = arith.constant dense<0.000000e+00> : vector<16xf32>
    %120 = vector.multi_reduction <add>, %119, %cst_46 [1] : vector<16x16xf32> to vector<16xf32>
    %121 = vector.shape_cast %120 : vector<16xf32> to vector<16x1xf32>
    %122 = tpu.reciprocal %121 {approx = true} : vector<16x1xf32> -> vector<16x1xf32>
    %123 = vector.broadcast %122 : vector<16x1xf32> to vector<16x16xf32>
    %124 = arith.mulf %119, %123 : vector<16x16xf32>
    %125 = vector.extract_strided_slice %41 {offsets = [0, 24], sizes = [16, 8], strides = [1, 1]} : vector<16x32xf32> to vector<16x8xf32>
    %cst_47 = arith.constant dense<0.000000e+00> : vector<16x8xf32>
    %126 = tpu.matmul %124, %125, %cst_47 {dimension_numbers = #tpu.dot_dimension_numbers<[1], [0], [0], [1], [0, 0, 1, 1], [], []>} : vector<16x16xf32>, vector<16x8xf32>, vector<16x8xf32> -> vector<16x8xf32>
    %c24 = arith.constant 24 : index
    %c0_48 = arith.constant 0 : index
    %127 = vector.load %arg3[%c24, %c0_48] : memref<32x32xf32, #tpu.memory_space<vmem>>, vector<8x32xf32>
    %cst_49 = arith.constant dense<0.000000e+00> : vector<16x32xf32>
    %128 = tpu.matmul %126, %127, %cst_49 {dimension_numbers = #tpu.dot_dimension_numbers<[1], [0], [0], [1], [0, 0, 1, 1], [], []>} : vector<16x8xf32>, vector<8x32xf32>, vector<16x32xf32> -> vector<16x32xf32>
    %129 = arith.addf %109, %128 : vector<16x32xf32>
    %130 = arith.addf %0, %129 : vector<16x32xf32>
    %131 = vector.broadcast %5 : vector<1x32xf32> to vector<16x32xf32>
    %132 = arith.addf %130, %131 : vector<16x32xf32>
    %cst_50 = arith.constant dense<0.000000e+00> : vector<16xf32>
    %133 = vector.multi_reduction <add>, %132, %cst_50 [1] : vector<16x32xf32> to vector<16xf32>
    %134 = vector.shape_cast %133 : vector<16xf32> to vector<16x1xf32>
    %cst_51 = arith.constant 3.200000e+01 : f32
    %135 = vector.broadcast %cst_51 : f32 to vector<16x1xf32>
    %136 = arith.divf %134, %135 : vector<16x1xf32>
    %137 = vector.broadcast %136 : vector<16x1xf32> to vector<16x32xf32>
    %138 = arith.subf %132, %137 : vector<16x32xf32>
    %139 = vector.broadcast %136 : vector<16x1xf32> to vector<16x32xf32>
    %140 = arith.subf %132, %139 : vector<16x32xf32>
    %141 = arith.mulf %138, %140 : vector<16x32xf32>
    %cst_52 = arith.constant dense<0.000000e+00> : vector<16xf32>
    %142 = vector.multi_reduction <add>, %141, %cst_52 [1] : vector<16x32xf32> to vector<16xf32>
    %143 = vector.shape_cast %142 : vector<16xf32> to vector<16x1xf32>
    %cst_53 = arith.constant 3.200000e+01 : f32
    %144 = vector.broadcast %cst_53 : f32 to vector<16x1xf32>
    %145 = arith.divf %143, %144 : vector<16x1xf32>
    %146 = vector.broadcast %136 : vector<16x1xf32> to vector<16x32xf32>
    %147 = arith.subf %132, %146 : vector<16x32xf32>
    %cst_54 = arith.constant 9.99999974E-6 : f32
    %148 = vector.broadcast %cst_54 : f32 to vector<16x1xf32>
    %149 = arith.addf %145, %148 : vector<16x1xf32>
    %150 = math.rsqrt %149 : vector<16x1xf32>
    %151 = vector.broadcast %150 : vector<16x1xf32> to vector<16x32xf32>
    %152 = arith.mulf %147, %151 : vector<16x32xf32>
    %153 = vector.broadcast %3 : vector<1x32xf32> to vector<16x32xf32>
    %154 = arith.mulf %152, %153 : vector<16x32xf32>
    %155 = vector.broadcast %4 : vector<1x32xf32> to vector<16x32xf32>
    %156 = arith.addf %154, %155 : vector<16x32xf32>
    %c0_55 = arith.constant 0 : index
    %c0_56 = arith.constant 0 : index
    %157 = vector.load %arg4[%c0_55, %c0_56] : memref<32x128xf32, #tpu.memory_space<vmem>>, vector<32x128xf32>
    %cst_57 = arith.constant dense<0.000000e+00> : vector<16x128xf32>
    %158 = tpu.matmul %156, %157, %cst_57 {dimension_numbers = #tpu.dot_dimension_numbers<[1], [0], [0], [1], [0, 0, 1, 1], [], []>} : vector<16x32xf32>, vector<32x128xf32>, vector<16x128xf32> -> vector<16x128xf32>
    %159 = vector.broadcast %7 : vector<1x128xf32> to vector<16x128xf32>
    %160 = arith.addf %158, %159 : vector<16x128xf32>
    %cst_58 = arith.constant 1.702000e+00 : f32
    %161 = vector.broadcast %cst_58 : f32 to vector<16x128xf32>
    %162 = arith.mulf %161, %160 : vector<16x128xf32>
    %163 = arith.negf %162 : vector<16x128xf32>
    %164 = math.exp %163 : vector<16x128xf32>
    %cst_59 = arith.constant 1.000000e+00 : f32
    %165 = vector.broadcast %cst_59 : f32 to vector<16x128xf32>
    %166 = arith.addf %165, %164 : vector<16x128xf32>
    %167 = arith.divf %165, %166 : vector<16x128xf32>
    %168 = arith.mulf %160, %167 : vector<16x128xf32>
    %c0_60 = arith.constant 0 : index
    %c0_61 = arith.constant 0 : index
    %169 = vector.load %arg5[%c0_60, %c0_61] : memref<128x32xf32, #tpu.memory_space<vmem>>, vector<128x32xf32>
    %cst_62 = arith.constant dense<0.000000e+00> : vector<16x32xf32>
    %170 = tpu.matmul %168, %169, %cst_62 {dimension_numbers = #tpu.dot_dimension_numbers<[1], [0], [0], [1], [0, 0, 1, 1], [], []>} : vector<16x128xf32>, vector<128x32xf32>, vector<16x32xf32> -> vector<16x32xf32>
    %171 = vector.broadcast %6 : vector<1x32xf32> to vector<16x32xf32>
    %172 = arith.addf %170, %171 : vector<16x32xf32>
    %173 = arith.addf %132, %172 : vector<16x32xf32>
    %c0_63 = arith.constant 0 : index
    %c0_64 = arith.constant 0 : index
    %174 = vector.load %arg8[%c0_63, %c0_64] : memref<16x32xf32, #tpu.memory_space<vmem>>, vector<16x32xf32>
    tpu.vector_store %arg8[%c0_63, %c0_64], %173 {strides = array<i32>} : memref<16x32xf32, #tpu.memory_space<vmem>>, vector<16x32xf32>,
    return
  }
  func.func @transform_0(%arg0: i32) -> (i32, i32) {
    %c0_i32 = arith.constant 0 : i32
    %c0_i32_0 = arith.constant 0 : i32
    %c0_i32_1 = arith.constant 0 : i32
    return %c0_i32, %c0_i32_0 : i32, i32
  }
  func.func @transform_1(%arg0: i32) -> (i32, i32) {
    %c0_i32 = arith.constant 0 : i32
    %c0_i32_0 = arith.constant 0 : i32
    %c0_i32_1 = arith.constant 0 : i32
    return %c0_i32, %c0_i32_0 : i32, i32
  }
  func.func @transform_2(%arg0: i32) -> (i32, i32) {
    %c0_i32 = arith.constant 0 : i32
    %c0_i32_0 = arith.constant 0 : i32
    %c0_i32_1 = arith.constant 0 : i32
    return %c0_i32, %c0_i32_0 : i32, i32
  }
  func.func @transform_3(%arg0: i32) -> (i32, i32) {
    %c0_i32 = arith.constant 0 : i32
    %c0_i32_0 = arith.constant 0 : i32
    %c0_i32_1 = arith.constant 0 : i32
    return %c0_i32, %c0_i32_0 : i32, i32
  }
  func.func @transform_4(%arg0: i32) -> (i32, i32) {
    %c0_i32 = arith.constant 0 : i32
    %c0_i32_0 = arith.constant 0 : i32
    %c0_i32_1 = arith.constant 0 : i32
    return %c0_i32, %c0_i32_0 : i32, i32
  }
  func.func @transform_5(%arg0: i32) -> (i32, i32) {
    %c0_i32 = arith.constant 0 : i32
    %c0_i32_0 = arith.constant 0 : i32
    %c0_i32_1 = arith.constant 0 : i32
    return %c0_i32, %c0_i32_0 : i32, i32
  }
  func.func @transform_6(%arg0: i32) -> (i32, i32) {
    %c0_i32 = arith.constant 0 : i32
    %c0_i32_0 = arith.constant 0 : i32
    %c0_i32_1 = arith.constant 0 : i32
    return %c0_i32, %c0_i32_0 : i32, i32
  }
  func.func @transform_7(%arg0: i32) -> (i32, i32) {
    %c0_i32 = arith.constant 0 : i32
    %c0_i32_0 = arith.constant 0 : i32
    %c0_i32_1 = arith.constant 0 : i32
    return %c0_i32, %c0_i32_0 : i32, i32
  }
}

</mosaic_0001>

<llo_original>
// kernel: tpu_custom_call.1
$region0: #{tpu_custom_call.1}
  #allocation0 [shape = 'u32[]', space=smem, size = 0x4, offset = 0x4, fixed_abs, tag = 'smem constant byte address 0x4 - core index']
  #allocation1 [shape = 'u32[144,128]{1,0:T(1,128)}', space=vmem, size = 0x12000, scoped, tag = 'internal scratch']
  %s0 = inlined_call_operand.vmem [shape: f32[16,32], index: 0, kind: input, shape index: {}]
  %s1 = inlined_call_operand.vmem [shape: f32[32,96], index: 1, kind: input, shape index: {}]
  %s2 = inlined_call_operand.vmem [shape: f32[32,32], index: 2, kind: input, shape index: {}]
  %s3 = inlined_call_operand.vmem [shape: f32[32,128], index: 3, kind: input, shape index: {}]
  %s4 = inlined_call_operand.vmem [shape: f32[128,32], index: 4, kind: input, shape index: {}]
  %s5 = inlined_call_operand.vmem [shape: f32[6,32], index: 5, kind: input, shape index: {}]
  %s6 = inlined_call_operand.vmem [shape: f32[2,128], index: 6, kind: input, shape index: {}]
  %s7 = inlined_call_operand.hbm [shape: f32[16,32], index: 7, kind: output, shape index: {}]
  %s8 = sld [smem:[#allocation0]]
  $region38: #{tpu_custom_call.1} parent=0
    _
  %s10 = ssub.s32 1, %s8
  %s11 = scalar_select 0, %s10, %s8
  $region1: #{tpu_custom_call.1} parent=0
    #allocation2 [shape = 'u8[8192]{0}', space=vmem, size = 0x2000, scoped, tag = 'output window, operand 0, single buffered']
    #allocation3 [shape = 's32[1]{0}', space=sflag, size = 0x4, scoped, tag = 'scoped memory for tpu_custom_call.1']
    %12 = vsyncpa [#allocation3], 0
    // Predicated region
    $region2: #{tpu_custom_call.1} parent=1 // pred_check
      _
    $region3: #{tpu_custom_call.1} parent=1 // pred_check_branch
      %14 = sbr.rel (0) target = $region5
    $region4: #{tpu_custom_call.1} parent=1 // pred_region
      _
    $region5: #{tpu_custom_call.1} parent=1 // pred_fallthru
      _
    // Predicated region
    $region6: #{tpu_custom_call.1} parent=1 // pred_check
      _
    $region7: #{tpu_custom_call.1} parent=1 // pred_check_branch
      %16 = sbr.rel (0) target = $region9
    $region8: #{tpu_custom_call.1} parent=1 // pred_region
      _
    $region9: #{tpu_custom_call.1} parent=1 // pred_fallthru
      _
    // Predicated region
    $region10: #{tpu_custom_call.1} parent=1 // pred_check
      _
    $region11: #{tpu_custom_call.1} parent=1 // pred_check_branch
      %18 = sbr.rel (0) target = $region13
    $region12: #{tpu_custom_call.1} parent=1 // pred_region
      _
    $region13: #{tpu_custom_call.1} parent=1 // pred_fallthru
      _
    // Predicated region
    $region14: #{tpu_custom_call.1} parent=1 // pred_check
      _
    $region15: #{tpu_custom_call.1} parent=1 // pred_check_branch
      %20 = sbr.rel (0) target = $region17
    $region16: #{tpu_custom_call.1} parent=1 // pred_region
      _
    $region17: #{tpu_custom_call.1} parent=1 // pred_fallthru
      _
    // Predicated region
    $region18: #{tpu_custom_call.1} parent=1 // pred_check
      _
    $region19: #{tpu_custom_call.1} parent=1 // pred_check_branch
      %22 = sbr.rel (0) target = $region21
    $region20: #{tpu_custom_call.1} parent=1 // pred_region
      _
    $region21: #{tpu_custom_call.1} parent=1 // pred_fallthru
      _
    // Predicated region
    $region22: #{tpu_custom_call.1} parent=1 // pred_check
      _
    $region23: #{tpu_custom_call.1} parent=1 // pred_check_branch
      %24 = sbr.rel (0) target = $region25
    $region24: #{tpu_custom_call.1} parent=1 // pred_region
      _
    $region25: #{tpu_custom_call.1} parent=1 // pred_fallthru
      _
    // Predicated region
    $region26: #{tpu_custom_call.1} parent=1 // pred_check
      _
    $region27: #{tpu_custom_call.1} parent=1 // pred_check_branch
      %26 = sbr.rel (0) target = $region29
    $region28: #{tpu_custom_call.1} parent=1 // pred_region
      _
    $region29: #{tpu_custom_call.1} parent=1 // pred_fallthru
      _
    %v27 = vld [vmem:[%s0] sm:$0xff]
    %v28 = vld [vmem:[%s0 + $0x8] sm:$0xff]
    %v29 = vld [vmem:[%s5] sm:$0x1]
    %v30 = vld [vmem:[%s5 + $0x1] sm:$0x1]
    %v31 = vld [vmem:[%s5 + $0x2] sm:$0x1]
    %v32 = vld [vmem:[%s5 + $0x3] sm:$0x1]
    %v33 = vld [vmem:[%s5 + $0x4] sm:$0x1]
    %v34 = vld [vmem:[%s5 + $0x5] sm:$0x1]
    %v35 = vld [vmem:[%s6] sm:$0x1]
    %v36 = vld [vmem:[%s6 + $0x1] sm:$0x1]
    %vm37 = vcmask 261120
    %v38 = vsel %vm37, %v27, 0.0
    %39 = vadd.xlane.f32.xlu0 %v38
    %v40 = vpop.xlane.xlu0 %39
    %v41 = vsel %vm37, %v28, 0.0
    %42 = vadd.xlane.f32.xlu0 %v41
    %v43 = vpop.xlane.xlu0 %42
    %v44 = vrcp.pop 32.0
    %v45 = vmul.f32 %v40, %v44
    %v46 = vmul.f32 %v43, %v44
    %v47 = vsub.f32 %v27, %v45
    %v48 = vsub.f32 %v28, %v46
    %v49 = vmul.f32 %v47, %v47
    %v50 = vmul.f32 %v48, %v48
    %v51 = vsel %vm37, %v49, 0.0
    %52 = vadd.xlane.f32.xlu0 %v51
    %v53 = vpop.xlane.xlu0 %52
    %v54 = vsel %vm37, %v50, 0.0
    %55 = vadd.xlane.f32.xlu0 %v54
    %v56 = vpop.xlane.xlu0 %55
    %v57 = vmul.f32 %v53, %v44
    %v58 = vmul.f32 %v56, %v44
    %v59 = vadd.f32 %v57, 1e-05
    %v60 = vadd.f32 %v58, 1e-05
    %v61 = vrsqrt.pop %v59
    %v62 = vrsqrt.pop %v60
    %v63 = vmul.f32 %v47, %v61
    %v64 = vmul.f32 %v48, %v62
    %v65 = vlaneseq
    %v66 = vshrl.u32 %v65, 7
    %v67 = vsub.s32 0, %v66
    %v68 = vrot.slane %v29, %v67
    %v69 = vmul.f32 %v63, %v68
    %v70 = vmul.f32 %v64, %v68
    %v71 = vlaneseq
    %v72 = vshrl.u32 %v71, 7
    %v73 = vsub.s32 0, %v72
    %v74 = vrot.slane %v30, %v73
    %v75 = vadd.f32 %v69, %v74
    %v76 = vadd.f32 %v70, %v74
    %v77 = vld [vmem:[%s1] sm:$0xff]
    %v78 = vld [vmem:[%s1 + $0x8] sm:$0xff]
    %v79 = vld [vmem:[%s1 + $0x10] sm:$0xff]
    %v80 = vld [vmem:[%s1 + $0x18] sm:$0xff]
    %v81 = vlaneseq
    %v82 = vshrl.u32 %v81, 7
    %v83 = vsub.s32 0, %v82
    %v84 = vrot.slane %v36, %v83
    %v86 = vsel %vm37, %v75, 0
    %v89 = vsel %vm37, %v76, 0
    %91 = vmatprep.subr.mxu0 0.0
    %92 = vmatpush1.msra.mxu0 %v77
    %93 = vmatprep.subr.mxu0 0.0
    %94 = vmatpush1.msra.mxu0 %v78
    %95 = vmatprep.subr.mxu0 0.0
    %96 = vmatpush1.msra.mxu0 %v79
    %97 = vmatprep.subr.mxu0 0.0
    %98 = vmatpush1.msra.mxu0 %v80
    %99 = vmatprep.subr.mxu0 0.0
    %100 = vmatpush1.msra.mxu0 0.0
    %101 = vmatprep.subr.mxu0 0.0
    %102 = vmatpush1.msra.mxu0 0.0
    %103 = vmatprep.subr.mxu0 0.0
    %104 = vmatpush1.msra.mxu0 0.0
    %105 = vmatprep.subr.mxu0 0.0
    %106 = vmatpush1.msra.mxu0 0.0
    %107 = vmatprep.subr.mxu0 0.0
    %108 = vmatpush1.msra.mxu0 0.0
    %109 = vmatprep.subr.mxu0 0.0
    %110 = vmatpush1.msra.mxu0 0.0
    %111 = vmatprep.subr.mxu0 0.0
    %112 = vmatpush1.msra.mxu0 0.0
    %113 = vmatprep.subr.mxu0 0.0
    %114 = vmatpush1.msra.mxu0 0.0
    %115 = vmatprep.subr.mxu0 0.0
    %116 = vmatpush1.msra.mxu0 0.0
    %117 = vmatprep.subr.mxu0 0.0
    %118 = vmatpush1.msra.mxu0 0.0
    %119 = vmatprep.subr.mxu0 0.0
    %120 = vmatpush1.msra.mxu0 0.0
    %121 = vmatprep.subr.mxu0 0.0
    %122 = vmatpush1.msra.mxu0 0.0
    %123 = vmatprep.subr.mxu0 0.0
    %124 = vmatpush1.msra.mxu0 0.0
    %125 = vmatprep.subr.mxu0 0.0
    %126 = vmatpush1.msra.mxu0 0.0
    %127 = vmatprep.subr.mxu0 0.0
    %128 = vmatpush1.msra.mxu0 0.0
    %129 = vmatprep.subr.mxu0 0.0
    %130 = vmatpush1.msra.mxu0 0.0
    %131 = vmatprep.subr.mxu0 0.0
    %132 = vmatpush1.msra.mxu0 0.0
    %133 = vmatprep.subr.mxu0 0.0
    %134 = vmatpush1.msra.mxu0 0.0
    %135 = vmatprep.subr.mxu0 0.0
    %136 = vmatpush1.msra.mxu0 0.0
    %137 = vmatprep.subr.mxu0 0.0
    %138 = vmatpush1.msra.mxu0 0.0
    %139 = vmatprep.subr.mxu0 0.0
    %140 = vmatpush1.msra.mxu0 0.0
    %141 = vmatprep.subr.mxu0 0.0
    %142 = vmatpush1.msra.mxu0 0.0
    %143 = vmatprep.subr.mxu0 0.0
    %144 = vmatpush1.msra.mxu0 0.0
    %145 = vmatprep.subr.mxu0 0.0
    %146 = vmatpush1.msra.mxu0 0.0
    %147 = vmatprep.subr.mxu0 0.0
    %148 = vmatpush1.msra.mxu0 0.0
    %149 = vmatprep.subr.mxu0 0.0
    %150 = vmatpush1.msra.mxu0 0.0
    %151 = vmatprep.subr.mxu0 0.0
    %152 = vmatpush1.msra.mxu0 0.0
    %153 = vmatprep.subr.mxu0 0.0
    %154 = vmatpush1.msra.mxu0 0.0
    %155 = vmatprep.mubr.f32.mxu0 0.0
    %156 = vmatmul.mubr.f32.gmra.mrb[0].mxu0 %v86
    %v157 = vpop.f32.mrb[0].mxu0
    %v158 = vadd.f32 %v84, %v157
    %v159 = vpop.f32.mrb[0].mxu0
    %160 = vmatprep.mubr.f32.mxu0 0.0
    %161 = vmatmul.mubr.f32.gmra.mrb[0].mxu0 %v89
    %v162 = vpop.f32.mrb[0].mxu0
    %v163 = vadd.f32 %v84, %v162
    %v164 = vpop.f32.mrb[0].mxu0
    %165 = vdwg.mxu0
    %v166 = vmul.f32 %v158, 0.35355338
    %v167 = vmul.f32 %v163, 0.35355338
    %v168 = vlaneseq
    %v169 = vshrl.u32 %v168, 7
    %v170 = vadd.s32 %v169, 8
    %v171 = vlaneseq
    %v172 = vand.u32 %v171, 127
    %vm173 = vcmp.ge.s32.totalorder %v169, %v172
    %vm174 = vcmp.ge.s32.totalorder %v170, %v172
    %vm175 = vcmp.ge.s32.totalorder %v172, 8
    %vm176 = vcmp.lt.s32.totalorder %v169, 8
    %vm177 = vcmp.lt.s32.totalorder %v170, 8
    %vm178 = vmor %vm175, %vm176
    %vm179 = vmor %vm175, %vm177
    %vm180 = vmand %vm173, %vm178
    %vm181 = vmand %vm174, %vm179
    %184 = vrot.lane.b32.xlu0 %v158, 96
    %v185 = vpop.permute.xlu0 %184
    %186 = vrot.lane.b32.xlu0 %v163, 96
    %v187 = vpop.permute.xlu0 %186
    %vm188 = vcmask 64512
    %v190 = vsel %vm188, %v166, 0
    %v193 = vsel %vm188, %v167, 0
    %v195 = vsel %vm188, %v185, 0
    %v197 = vsel %vm188, %v187, 0
    %199 = vmatprep.subr.mxu0 0.0
    %200 = vmatpush1.xpose.msra.mxu0 %v195
    %201 = vmatprep.subr.mxu0 0.0
    %202 = vmatpush1.xpose.msra.mxu0 %v197
    %203 = vmatprep.subr.mxu0 0.0
    %204 = vmatpush1.xpose.msra.mxu0 0.0
    %205 = vmatprep.subr.mxu0 0.0
    %206 = vmatpush1.xpose.msra.mxu0 0.0
    %207 = vmatprep.subr.mxu0 0.0
    %208 = vmatpush1.xpose.msra.mxu0 0.0
    %209 = vmatprep.subr.mxu0 0.0
    %210 = vmatpush1.xpose.msra.mxu0 0.0
    %211 = vmatprep.subr.mxu0 0.0
    %212 = vmatpush1.xpose.msra.mxu0 0.0
    %213 = vmatprep.subr.mxu0 0.0
    %214 = vmatpush1.xpose.msra.mxu0 0.0
    %215 = vmatprep.subr.mxu0 0.0
    %216 = vmatpush1.xpose.msra.mxu0 0.0
    %217 = vmatprep.subr.mxu0 0.0
    %218 = vmatpush1.xpose.msra.mxu0 0.0
    %219 = vmatprep.subr.mxu0 0.0
    %220 = vmatpush1.xpose.msra.mxu0 0.0
    %221 = vmatprep.subr.mxu0 0.0
    %222 = vmatpush1.xpose.msra.mxu0 0.0
    %223 = vmatprep.subr.mxu0 0.0
    %224 = vmatpush1.xpose.msra.mxu0 0.0
    %225 = vmatprep.subr.mxu0 0.0
    %226 = vmatpush1.xpose.msra.mxu0 0.0
    %227 = vmatprep.subr.mxu0 0.0
    %228 = vmatpush1.xpose.msra.mxu0 0.0
    %229 = vmatprep.subr.mxu0 0.0
    %230 = vmatpush1.xpose.msra.mxu0 0.0
    %231 = vmatprep.subr.mxu0 0.0
    %232 = vmatpush1.xpose.msra.mxu0 0.0
    %233 = vmatprep.subr.mxu0 0.0
    %234 = vmatpush1.xpose.msra.mxu0 0.0
    %235 = vmatprep.subr.mxu0 0.0
    %236 = vmatpush1.xpose.msra.mxu0 0.0
    %237 = vmatprep.subr.mxu0 0.0
    %238 = vmatpush1.xpose.msra.mxu0 0.0
    %239 = vmatprep.subr.mxu0 0.0
    %240 = vmatpush1.xpose.msra.mxu0 0.0
    %241 = vmatprep.subr.mxu0 0.0
    %242 = vmatpush1.xpose.msra.mxu0 0.0
    %243 = vmatprep.subr.mxu0 0.0
    %244 = vmatpush1.xpose.msra.mxu0 0.0
    %245 = vmatprep.subr.mxu0 0.0
    %246 = vmatpush1.xpose.msra.mxu0 0.0
    %247 = vmatprep.subr.mxu0 0.0
    %248 = vmatpush1.xpose.msra.mxu0 0.0
    %249 = vmatprep.subr.mxu0 0.0
    %250 = vmatpush1.xpose.msra.mxu0 0.0
    %251 = vmatprep.subr.mxu0 0.0
    %252 = vmatpush1.xpose.msra.mxu0 0.0
    %253 = vmatprep.subr.mxu0 0.0
    %254 = vmatpush1.xpose.msra.mxu0 0.0
    %255 = vmatprep.subr.mxu0 0.0
    %256 = vmatpush1.xpose.msra.mxu0 0.0
    %257 = vmatprep.subr.mxu0 0.0
    %258 = vmatpush1.xpose.msra.mxu0 0.0
    %259 = vmatprep.subr.mxu0 0.0
    %260 = vmatpush1.xpose.msra.mxu0 0.0
    %261 = vmatprep.subr.mxu0 0.0
    %262 = vmatpush1.xpose.msra.mxu0 0.0
    %263 = vmatprep.mubr.f32.mxu0 0.0
    %264 = vmatmul.mubr.f32.gmra.mrb[0].mxu0 %v190
    %v265 = vpop.f32.mrb[0].mxu0
    %v266 = vadd.f32 0.0, %v265
    %v267 = vpop.f32.mrb[0].mxu0
    %268 = vmatprep.mubr.f32.mxu0 0.0
    %269 = vmatmul.mubr.f32.gmra.mrb[0].mxu0 %v193
    %v270 = vpop.f32.mrb[0].mxu0
    %v271 = vadd.f32 0.0, %v270
    %v272 = vpop.f32.mrb[0].mxu0
    %273 = vdwg.mxu0
    %v274 = vsel %vm180, %v266, -1e+30
    %v275 = vsel %vm181, %v271, -1e+30
    %vm276 = vcmask 130048
    %v277 = vsel %vm276, %v274, -inf
    %278 = vmax.xlane.f32.xlu0 %v277
    %v279 = vpop.xlane.xlu0 %278
    %v280 = vsel %vm276, %v275, -inf
    %281 = vmax.xlane.f32.xlu0 %v280
    %v282 = vpop.xlane.xlu0 %281
    %v283 = vsub.f32 %v274, %v279
    %v284 = vsub.f32 %v275, %v282
    %v285 = vmul.f32 %v283, 1.442695
    %v286 = vpow.pop %v285
    %v287 = vmul.f32 %v284, 1.442695
    %v288 = vpow.pop %v287
    %v289 = vsel %vm276, %v286, 0.0
    %290 = vadd.xlane.f32.xlu0 %v289
    %v291 = vpop.xlane.xlu0 %290
    %v292 = vsel %vm276, %v288, 0.0
    %293 = vadd.xlane.f32.xlu0 %v292
    %v294 = vpop.xlane.xlu0 %293
    %v295 = vrcp.pop %v291
    %v296 = vrcp.pop %v294
    %v297 = vmul.f32 %v286, %v295
    %v298 = vmul.f32 %v288, %v296
    %299 = vrot.lane.b32.xlu0 %v158, 64
    %v300 = vpop.permute.xlu0 %299
    %301 = vrot.lane.b32.xlu0 %v163, 64
    %v302 = vpop.permute.xlu0 %301
    %v306 = vsel %vm276, %v297, 0
    %v309 = vsel %vm276, %v298, 0
    %311 = vmatprep.subr.mxu0 0.0
    %312 = vmatpush1.msra.mxu0 %v300
    %313 = vmatprep.subr.mxu0 0.0
    %314 = vmatpush1.msra.mxu0 %v302
    %315 = vmatprep.subr.mxu0 0.0
    %316 = vmatpush1.msra.mxu0 0.0
    %317 = vmatprep.subr.mxu0 0.0
    %318 = vmatpush1.msra.mxu0 0.0
    %319 = vmatprep.subr.mxu0 0.0
    %320 = vmatpush1.msra.mxu0 0.0
    %321 = vmatprep.subr.mxu0 0.0
    %322 = vmatpush1.msra.mxu0 0.0
    %323 = vmatprep.subr.mxu0 0.0
    %324 = vmatpush1.msra.mxu0 0.0
    %325 = vmatprep.subr.mxu0 0.0
    %326 = vmatpush1.msra.mxu0 0.0
    %327 = vmatprep.subr.mxu0 0.0
    %328 = vmatpush1.msra.mxu0 0.0
    %329 = vmatprep.subr.mxu0 0.0
    %330 = vmatpush1.msra.mxu0 0.0
    %331 = vmatprep.subr.mxu0 0.0
    %332 = vmatpush1.msra.mxu0 0.0
    %333 = vmatprep.subr.mxu0 0.0
    %334 = vmatpush1.msra.mxu0 0.0
    %335 = vmatprep.subr.mxu0 0.0
    %336 = vmatpush1.msra.mxu0 0.0
    %337 = vmatprep.subr.mxu0 0.0
    %338 = vmatpush1.msra.mxu0 0.0
    %339 = vmatprep.subr.mxu0 0.0
    %340 = vmatpush1.msra.mxu0 0.0
    %341 = vmatprep.subr.mxu0 0.0
    %342 = vmatpush1.msra.mxu0 0.0
    %343 = vmatprep.subr.mxu0 0.0
    %344 = vmatpush1.msra.mxu0 0.0
    %345 = vmatprep.subr.mxu0 0.0
    %346 = vmatpush1.msra.mxu0 0.0
    %347 = vmatprep.subr.mxu0 0.0
    %348 = vmatpush1.msra.mxu0 0.0
    %349 = vmatprep.subr.mxu0 0.0
    %350 = vmatpush1.msra.mxu0 0.0
    %351 = vmatprep.subr.mxu0 0.0
    %352 = vmatpush1.msra.mxu0 0.0
    %353 = vmatprep.subr.mxu0 0.0
    %354 = vmatpush1.msra.mxu0 0.0
    %355 = vmatprep.subr.mxu0 0.0
    %356 = vmatpush1.msra.mxu0 0.0
    %357 = vmatprep.subr.mxu0 0.0
    %358 = vmatpush1.msra.mxu0 0.0
    %359 = vmatprep.subr.mxu0 0.0
    %360 = vmatpush1.msra.mxu0 0.0
    %361 = vmatprep.subr.mxu0 0.0
    %362 = vmatpush1.msra.mxu0 0.0
    %363 = vmatprep.subr.mxu0 0.0
    %364 = vmatpush1.msra.mxu0 0.0
    %365 = vmatprep.subr.mxu0 0.0
    %366 = vmatpush1.msra.mxu0 0.0
    %367 = vmatprep.subr.mxu0 0.0
    %368 = vmatpush1.msra.mxu0 0.0
    %369 = vmatprep.subr.mxu0 0.0
    %370 = vmatpush1.msra.mxu0 0.0
    %371 = vmatprep.subr.mxu0 0.0
    %372 = vmatpush1.msra.mxu0 0.0
    %373 = vmatprep.subr.mxu0 0.0
    %374 = vmatpush1.msra.mxu0 0.0
    %375 = vmatprep.mubr.f32.mxu0 0.0
    %376 = vmatmul.mubr.f32.gmra.mrb[0].mxu0 %v306
    %v377 = vpop.f32.mrb[0].mxu0
    %v378 = vadd.f32 0.0, %v377
    %v379 = vpop.f32.mrb[0].mxu0
    %380 = vmatprep.mubr.f32.mxu0 0.0
    %381 = vmatmul.mubr.f32.gmra.mrb[0].mxu0 %v309
    %v382 = vpop.f32.mrb[0].mxu0
    %v383 = vadd.f32 0.0, %v382
    %v384 = vpop.f32.mrb[0].mxu0
    %385 = vdwg.mxu0
    %v386 = vld [vmem:[%s2] sm:$0xff]
    %387 = vrot.lane.b32.xlu0 %v166, 120
    %v388 = vpop.permute.xlu0 %387
    %389 = vrot.lane.b32.xlu0 %v167, 120
    %v390 = vpop.permute.xlu0 %389
    %391 = vrot.lane.b32.xlu0 %v158, 88
    %v392 = vpop.permute.xlu0 %391
    %393 = vrot.lane.b32.xlu0 %v163, 88
    %v394 = vpop.permute.xlu0 %393
    %v395 = vsel %vm188, %v388, 0
    %v397 = vsel %vm188, %v390, 0
    %v399 = vsel %vm188, %v392, 0
    %v401 = vsel %vm188, %v394, 0
    %403 = vmatprep.subr.mxu0 0.0
    %404 = vmatpush1.xpose.msra.mxu0 %v399
    %405 = vmatprep.subr.mxu0 0.0
    %406 = vmatpush1.xpose.msra.mxu0 %v401
    %407 = vmatprep.subr.mxu0 0.0
    %408 = vmatpush1.xpose.msra.mxu0 0.0
    %409 = vmatprep.subr.mxu0 0.0
    %410 = vmatpush1.xpose.msra.mxu0 0.0
    %411 = vmatprep.subr.mxu0 0.0
    %412 = vmatpush1.xpose.msra.mxu0 0.0
    %413 = vmatprep.subr.mxu0 0.0
    %414 = vmatpush1.xpose.msra.mxu0 0.0
    %415 = vmatprep.subr.mxu0 0.0
    %416 = vmatpush1.xpose.msra.mxu0 0.0
    %417 = vmatprep.subr.mxu0 0.0
    %418 = vmatpush1.xpose.msra.mxu0 0.0
    %419 = vmatprep.subr.mxu0 0.0
    %420 = vmatpush1.xpose.msra.mxu0 0.0
    %421 = vmatprep.subr.mxu0 0.0
    %422 = vmatpush1.xpose.msra.mxu0 0.0
    %423 = vmatprep.subr.mxu0 0.0
    %424 = vmatpush1.xpose.msra.mxu0 0.0
    %425 = vmatprep.subr.mxu0 0.0
    %426 = vmatpush1.xpose.msra.mxu0 0.0
    %427 = vmatprep.subr.mxu0 0.0
    %428 = vmatpush1.xpose.msra.mxu0 0.0
    %429 = vmatprep.subr.mxu0 0.0
    %430 = vmatpush1.xpose.msra.mxu0 0.0
    %431 = vmatprep.subr.mxu0 0.0
    %432 = vmatpush1.xpose.msra.mxu0 0.0
    %433 = vmatprep.subr.mxu0 0.0
    %434 = vmatpush1.xpose.msra.mxu0 0.0
    %435 = vmatprep.subr.mxu0 0.0
    %436 = vmatpush1.xpose.msra.mxu0 0.0
    %437 = vmatprep.subr.mxu0 0.0
    %438 = vmatpush1.xpose.msra.mxu0 0.0
    %439 = vmatprep.subr.mxu0 0.0
    %440 = vmatpush1.xpose.msra.mxu0 0.0
    %441 = vmatprep.subr.mxu0 0.0
    %442 = vmatpush1.xpose.msra.mxu0 0.0
    %443 = vmatprep.subr.mxu0 0.0
    %444 = vmatpush1.xpose.msra.mxu0 0.0
    %445 = vmatprep.subr.mxu0 0.0
    %446 = vmatpush1.xpose.msra.mxu0 0.0
    %447 = vmatprep.subr.mxu0 0.0
    %448 = vmatpush1.xpose.msra.mxu0 0.0
    %449 = vmatprep.subr.mxu0 0.0
    %450 = vmatpush1.xpose.msra.mxu0 0.0
    %451 = vmatprep.subr.mxu0 0.0
    %452 = vmatpush1.xpose.msra.mxu0 0.0
    %453 = vmatprep.subr.mxu0 0.0
    %454 = vmatpush1.xpose.msra.mxu0 0.0
    %455 = vmatprep.subr.mxu0 0.0
    %456 = vmatpush1.xpose.msra.mxu0 0.0
    %457 = vmatprep.subr.mxu0 0.0
    %458 = vmatpush1.xpose.msra.mxu0 0.0
    %459 = vmatprep.subr.mxu0 0.0
    %460 = vmatpush1.xpose.msra.mxu0 0.0
    %461 = vmatprep.subr.mxu0 0.0
    %462 = vmatpush1.xpose.msra.mxu0 0.0
    %463 = vmatprep.subr.mxu0 0.0
    %464 = vmatpush1.xpose.msra.mxu0 0.0
    %465 = vmatprep.subr.mxu0 0.0
    %466 = vmatpush1.xpose.msra.mxu0 0.0
    %467 = vmatprep.mubr.f32.mxu0 0.0
    %468 = vmatmul.mubr.f32.gmra.mrb[0].mxu0 %v395
    %v469 = vpop.f32.mrb[0].mxu0
    %v470 = vadd.f32 0.0, %v469
    %v471 = vpop.f32.mrb[0].mxu0
    %472 = vmatprep.mubr.f32.mxu0 0.0
    %473 = vmatmul.mubr.f32.gmra.mrb[0].mxu0 %v397
    %v474 = vpop.f32.mrb[0].mxu0
    %v475 = vadd.f32 0.0, %v474
    %v476 = vpop.f32.mrb[0].mxu0
    %477 = vdwg.mxu0
    %v478 = vsel %vm180, %v470, -1e+30
    %v479 = vsel %vm181, %v475, -1e+30
    %v480 = vsel %vm276, %v478, -inf
    %481 = vmax.xlane.f32.xlu0 %v480
    %v482 = vpop.xlane.xlu0 %481
    %v483 = vsel %vm276, %v479, -inf
    %484 = vmax.xlane.f32.xlu0 %v483
    %v485 = vpop.xlane.xlu0 %484
    %v486 = vsub.f32 %v478, %v482
    %v487 = vsub.f32 %v479, %v485
    %v488 = vmul.f32 %v486, 1.442695
    %v489 = vpow.pop %v488
    %v490 = vmul.f32 %v487, 1.442695
    %v491 = vpow.pop %v490
    %v492 = vsel %vm276, %v489, 0.0
    %493 = vadd.xlane.f32.xlu0 %v492
    %v494 = vpop.xlane.xlu0 %493
    %v495 = vsel %vm276, %v491, 0.0
    %496 = vadd.xlane.f32.xlu0 %v495
    %v497 = vpop.xlane.xlu0 %496
    %v498 = vrcp.pop %v494
    %v499 = vrcp.pop %v497
    %v500 = vmul.f32 %v489, %v498
    %v501 = vmul.f32 %v491, %v499
    %502 = vrot.lane.b32.xlu0 %v158, 56
    %v503 = vpop.permute.xlu0 %502
    %504 = vrot.lane.b32.xlu0 %v163, 56
    %v505 = vpop.permute.xlu0 %504
    %v509 = vsel %vm276, %v500, 0
    %v512 = vsel %vm276, %v501, 0
    %514 = vmatprep.subr.mxu0 0.0
    %515 = vmatpush1.msra.mxu0 %v503
    %516 = vmatprep.subr.mxu0 0.0
    %517 = vmatpush1.msra.mxu0 %v505
    %518 = vmatprep.subr.mxu0 0.0
    %519 = vmatpush1.msra.mxu0 0.0
    %520 = vmatprep.subr.mxu0 0.0
    %521 = vmatpush1.msra.mxu0 0.0
    %522 = vmatprep.subr.mxu0 0.0
    %523 = vmatpush1.msra.mxu0 0.0
    %524 = vmatprep.subr.mxu0 0.0
    %525 = vmatpush1.msra.mxu0 0.0
    %526 = vmatprep.subr.mxu0 0.0
    %527 = vmatpush1.msra.mxu0 0.0
    %528 = vmatprep.subr.mxu0 0.0
    %529 = vmatpush1.msra.mxu0 0.0
    %530 = vmatprep.subr.mxu0 0.0
    %531 = vmatpush1.msra.mxu0 0.0
    %532 = vmatprep.subr.mxu0 0.0
    %533 = vmatpush1.msra.mxu0 0.0
    %534 = vmatprep.subr.mxu0 0.0
    %535 = vmatpush1.msra.mxu0 0.0
    %536 = vmatprep.subr.mxu0 0.0
    %537 = vmatpush1.msra.mxu0 0.0
    %538 = vmatprep.subr.mxu0 0.0
    %539 = vmatpush1.msra.mxu0 0.0
    %540 = vmatprep.subr.mxu0 0.0
    %541 = vmatpush1.msra.mxu0 0.0
    %542 = vmatprep.subr.mxu0 0.0
    %543 = vmatpush1.msra.mxu0 0.0
    %544 = vmatprep.subr.mxu0 0.0
    %545 = vmatpush1.msra.mxu0 0.0
    %546 = vmatprep.subr.mxu0 0.0
    %547 = vmatpush1.msra.mxu0 0.0
    %548 = vmatprep.subr.mxu0 0.0
    %549 = vmatpush1.msra.mxu0 0.0
    %550 = vmatprep.subr.mxu0 0.0
    %551 = vmatpush1.msra.mxu0 0.0
    %552 = vmatprep.subr.mxu0 0.0
    %553 = vmatpush1.msra.mxu0 0.0
    %554 = vmatprep.subr.mxu0 0.0
    %555 = vmatpush1.msra.mxu0 0.0
    %556 = vmatprep.subr.mxu0 0.0
    %557 = vmatpush1.msra.mxu0 0.0
    %558 = vmatprep.subr.mxu0 0.0
    %559 = vmatpush1.msra.mxu0 0.0
    %560 = vmatprep.subr.mxu0 0.0
    %561 = vmatpush1.msra.mxu0 0.0
    %562 = vmatprep.subr.mxu0 0.0
    %563 = vmatpush1.msra.mxu0 0.0
    %564 = vmatprep.subr.mxu0 0.0
    %565 = vmatpush1.msra.mxu0 0.0
    %566 = vmatprep.subr.mxu0 0.0
    %567 = vmatpush1.msra.mxu0 0.0
    %568 = vmatprep.subr.mxu0 0.0
    %569 = vmatpush1.msra.mxu0 0.0
    %570 = vmatprep.subr.mxu0 0.0
    %571 = vmatpush1.msra.mxu0 0.0
    %572 = vmatprep.subr.mxu0 0.0
    %573 = vmatpush1.msra.mxu0 0.0
    %574 = vmatprep.subr.mxu0 0.0
    %575 = vmatpush1.msra.mxu0 0.0
    %576 = vmatprep.subr.mxu0 0.0
    %577 = vmatpush1.msra.mxu0 0.0
    %578 = vmatprep.mubr.f32.mxu0 0.0
    %579 = vmatmul.mubr.f32.gmra.mrb[0].mxu0 %v509
    %v580 = vpop.f32.mrb[0].mxu0
    %v581 = vadd.f32 0.0, %v580
    %v582 = vpop.f32.mrb[0].mxu0
    %583 = vmatprep.mubr.f32.mxu0 0.0
    %584 = vmatmul.mubr.f32.gmra.mrb[0].mxu0 %v512
    %v585 = vpop.f32.mrb[0].mxu0
    %v586 = vadd.f32 0.0, %v585
    %v587 = vpop.f32.mrb[0].mxu0
    %588 = vdwg.mxu0
    %v589 = vld [vmem:[%s2 + $0x8] sm:$0xff]
    %v591 = vsel %vm188, %v581, 0
    %v594 = vsel %vm188, %v586, 0
    %596 = vmatprep.subr.mxu0 0.0
    %597 = vmatpush1.msra.mxu0 %v589
    %598 = vmatprep.subr.mxu0 0.0
    %599 = vmatpush1.msra.mxu0 0.0
    %600 = vmatprep.subr.mxu0 0.0
    %601 = vmatpush1.msra.mxu0 0.0
    %602 = vmatprep.subr.mxu0 0.0
    %603 = vmatpush1.msra.mxu0 0.0
    %604 = vmatprep.subr.mxu0 0.0
    %605 = vmatpush1.msra.mxu0 0.0
    %606 = vmatprep.subr.mxu0 0.0
    %607 = vmatpush1.msra.mxu0 0.0
    %608 = vmatprep.subr.mxu0 0.0
    %609 = vmatpush1.msra.mxu0 0.0
    %610 = vmatprep.subr.mxu0 0.0
    %611 = vmatpush1.msra.mxu0 0.0
    %612 = vmatprep.subr.mxu0 0.0
    %613 = vmatpush1.msra.mxu0 0.0
    %614 = vmatprep.subr.mxu0 0.0
    %615 = vmatpush1.msra.mxu0 0.0
    %616 = vmatprep.subr.mxu0 0.0
    %617 = vmatpush1.msra.mxu0 0.0
    %618 = vmatprep.subr.mxu0 0.0
    %619 = vmatpush1.msra.mxu0 0.0
    %620 = vmatprep.subr.mxu0 0.0
    %621 = vmatpush1.msra.mxu0 0.0
    %622 = vmatprep.subr.mxu0 0.0
    %623 = vmatpush1.msra.mxu0 0.0
    %624 = vmatprep.subr.mxu0 0.0
    %625 = vmatpush1.msra.mxu0 0.0
    %626 = vmatprep.subr.mxu0 0.0
    %627 = vmatpush1.msra.mxu0 0.0
    %628 = vmatprep.subr.mxu0 0.0
    %629 = vmatpush1.msra.mxu0 0.0
    %630 = vmatprep.subr.mxu0 0.0
    %631 = vmatpush1.msra.mxu0 0.0
    %632 = vmatprep.subr.mxu0 0.0
    %633 = vmatpush1.msra.mxu0 0.0
    %634 = vmatprep.subr.mxu0 0.0
    %635 = vmatpush1.msra.mxu0 0.0
    %636 = vmatprep.subr.mxu0 0.0
    %637 = vmatpush1.msra.mxu0 0.0
    %638 = vmatprep.subr.mxu0 0.0
    %639 = vmatpush1.msra.mxu0 0.0
    %640 = vmatprep.subr.mxu0 0.0
    %641 = vmatpush1.msra.mxu0 0.0
    %642 = vmatprep.subr.mxu0 0.0
    %643 = vmatpush1.msra.mxu0 0.0
    %644 = vmatprep.subr.mxu0 0.0
    %645 = vmatpush1.msra.mxu0 0.0
    %646 = vmatprep.subr.mxu0 0.0
    %647 = vmatpush1.msra.mxu0 0.0
    %648 = vmatprep.subr.mxu0 0.0
    %649 = vmatpush1.msra.mxu0 0.0
    %650 = vmatprep.subr.mxu0 0.0
    %651 = vmatpush1.msra.mxu0 0.0
    %652 = vmatprep.subr.mxu0 0.0
    %653 = vmatpush1.msra.mxu0 0.0
    %654 = vmatprep.subr.mxu0 0.0
    %655 = vmatpush1.msra.mxu0 0.0
    %656 = vmatprep.subr.mxu0 0.0
    %657 = vmatpush1.msra.mxu0 0.0
    %658 = vmatprep.subr.mxu0 0.0
    %659 = vmatpush1.msra.mxu0 0.0
    %660 = vmatprep.mubr.f32.mxu0 0.0
    %661 = vmatmul.mubr.f32.gmra.mrb[0].mxu0 %v591
    %v662 = vpop.f32.mrb[0].mxu0
    %v663 = vadd.f32 0.0, %v662
    %v664 = vpop.f32.mrb[0].mxu0
    %665 = vmatprep.mubr.f32.mxu0 0.0
    %666 = vmatmul.mubr.f32.gmra.mrb[0].mxu0 %v594
    %v667 = vpop.f32.mrb[0].mxu0
    %v668 = vadd.f32 0.0, %v667
    %v669 = vpop.f32.mrb[0].mxu0
    %670 = vdwg.mxu0
    %v672 = vsel %vm188, %v378, 0
    %v675 = vsel %vm188, %v383, 0
    %677 = vmatprep.subr.mxu0 0.0
    %678 = vmatpush1.msra.mxu0 %v386
    %679 = vmatprep.subr.mxu0 0.0
    %680 = vmatpush1.msra.mxu0 0.0
    %681 = vmatprep.subr.mxu0 0.0
    %682 = vmatpush1.msra.mxu0 0.0
    %683 = vmatprep.subr.mxu0 0.0
    %684 = vmatpush1.msra.mxu0 0.0
    %685 = vmatprep.subr.mxu0 0.0
    %686 = vmatpush1.msra.mxu0 0.0
    %687 = vmatprep.subr.mxu0 0.0
    %688 = vmatpush1.msra.mxu0 0.0
    %689 = vmatprep.subr.mxu0 0.0
    %690 = vmatpush1.msra.mxu0 0.0
    %691 = vmatprep.subr.mxu0 0.0
    %692 = vmatpush1.msra.mxu0 0.0
    %693 = vmatprep.subr.mxu0 0.0
    %694 = vmatpush1.msra.mxu0 0.0
    %695 = vmatprep.subr.mxu0 0.0
    %696 = vmatpush1.msra.mxu0 0.0
    %697 = vmatprep.subr.mxu0 0.0
    %698 = vmatpush1.msra.mxu0 0.0
    %699 = vmatprep.subr.mxu0 0.0
    %700 = vmatpush1.msra.mxu0 0.0
    %701 = vmatprep.subr.mxu0 0.0
    %702 = vmatpush1.msra.mxu0 0.0
    %703 = vmatprep.subr.mxu0 0.0
    %704 = vmatpush1.msra.mxu0 0.0
    %705 = vmatprep.subr.mxu0 0.0
    %706 = vmatpush1.msra.mxu0 0.0
    %707 = vmatprep.subr.mxu0 0.0
    %708 = vmatpush1.msra.mxu0 0.0
    %709 = vmatprep.subr.mxu0 0.0
    %710 = vmatpush1.msra.mxu0 0.0
    %711 = vmatprep.subr.mxu0 0.0
    %712 = vmatpush1.msra.mxu0 0.0
    %713 = vmatprep.subr.mxu0 0.0
    %714 = vmatpush1.msra.mxu0 0.0
    %715 = vmatprep.subr.mxu0 0.0
    %716 = vmatpush1.msra.mxu0 0.0
    %717 = vmatprep.subr.mxu0 0.0
    %718 = vmatpush1.msra.mxu0 0.0
    %719 = vmatprep.subr.mxu0 0.0
    %720 = vmatpush1.msra.mxu0 0.0
    %721 = vmatprep.subr.mxu0 0.0
    %722 = vmatpush1.msra.mxu0 0.0
    %723 = vmatprep.subr.mxu0 0.0
    %724 = vmatpush1.msra.mxu0 0.0
    %725 = vmatprep.subr.mxu0 0.0
    %726 = vmatpush1.msra.mxu0 0.0
    %727 = vmatprep.subr.mxu0 0.0
    %728 = vmatpush1.msra.mxu0 0.0
    %729 = vmatprep.subr.mxu0 0.0
    %730 = vmatpush1.msra.mxu0 0.0
    %731 = vmatprep.subr.mxu0 0.0
    %732 = vmatpush1.msra.mxu0 0.0
    %733 = vmatprep.subr.mxu0 0.0
    %734 = vmatpush1.msra.mxu0 0.0
    %735 = vmatprep.subr.mxu0 0.0
    %736 = vmatpush1.msra.mxu0 0.0
    %737 = vmatprep.subr.mxu0 0.0
    %738 = vmatpush1.msra.mxu0 0.0
    %739 = vmatprep.subr.mxu0 0.0
    %740 = vmatpush1.msra.mxu0 0.0
    %741 = vmatprep.mubr.f32.mxu0 0.0
    %742 = vmatmul.mubr.f32.gmra.mrb[0].mxu0 %v672
    %v743 = vpop.f32.mrb[0].mxu0
    %v744 = vadd.f32 %v663, %v743
    %v745 = vpop.f32.mrb[0].mxu0
    %746 = vmatprep.mubr.f32.mxu0 0.0
    %747 = vmatmul.mubr.f32.gmra.mrb[0].mxu0 %v675
    %v748 = vpop.f32.mrb[0].mxu0
    %v749 = vadd.f32 %v668, %v748
    %v750 = vpop.f32.mrb[0].mxu0
    %751 = vdwg.mxu0
    %752 = vrot.lane.b32.xlu0 %v166, 112
    %v753 = vpop.permute.xlu0 %752
    %754 = vrot.lane.b32.xlu0 %v167, 112
    %v755 = vpop.permute.xlu0 %754
    %756 = vrot.lane.b32.xlu0 %v158, 80
    %v757 = vpop.permute.xlu0 %756
    %758 = vrot.lane.b32.xlu0 %v163, 80
    %v759 = vpop.permute.xlu0 %758
    %v760 = vsel %vm188, %v753, 0
    %v762 = vsel %vm188, %v755, 0
    %v764 = vsel %vm188, %v757, 0
    %v766 = vsel %vm188, %v759, 0
    %768 = vmatprep.subr.mxu0 0.0
    %769 = vmatpush1.xpose.msra.mxu0 %v764
    %770 = vmatprep.subr.mxu0 0.0
    %771 = vmatpush1.xpose.msra.mxu0 %v766
    %772 = vmatprep.subr.mxu0 0.0
    %773 = vmatpush1.xpose.msra.mxu0 0.0
    %774 = vmatprep.subr.mxu0 0.0
    %775 = vmatpush1.xpose.msra.mxu0 0.0
    %776 = vmatprep.subr.mxu0 0.0
    %777 = vmatpush1.xpose.msra.mxu0 0.0
    %778 = vmatprep.subr.mxu0 0.0
    %779 = vmatpush1.xpose.msra.mxu0 0.0
    %780 = vmatprep.subr.mxu0 0.0
    %781 = vmatpush1.xpose.msra.mxu0 0.0
    %782 = vmatprep.subr.mxu0 0.0
    %783 = vmatpush1.xpose.msra.mxu0 0.0
    %784 = vmatprep.subr.mxu0 0.0
    %785 = vmatpush1.xpose.msra.mxu0 0.0
    %786 = vmatprep.subr.mxu0 0.0
    %787 = vmatpush1.xpose.msra.mxu0 0.0
    %788 = vmatprep.subr.mxu0 0.0
    %789 = vmatpush1.xpose.msra.mxu0 0.0
    %790 = vmatprep.subr.mxu0 0.0
    %791 = vmatpush1.xpose.msra.mxu0 0.0
    %792 = vmatprep.subr.mxu0 0.0
    %793 = vmatpush1.xpose.msra.mxu0 0.0
    %794 = vmatprep.subr.mxu0 0.0
    %795 = vmatpush1.xpose.msra.mxu0 0.0
    %796 = vmatprep.subr.mxu0 0.0
    %797 = vmatpush1.xpose.msra.mxu0 0.0
    %798 = vmatprep.subr.mxu0 0.0
    %799 = vmatpush1.xpose.msra.mxu0 0.0
    %800 = vmatprep.subr.mxu0 0.0
    %801 = vmatpush1.xpose.msra.mxu0 0.0
    %802 = vmatprep.subr.mxu0 0.0
    %803 = vmatpush1.xpose.msra.mxu0 0.0
    %804 = vmatprep.subr.mxu0 0.0
    %805 = vmatpush1.xpose.msra.mxu0 0.0
    %806 = vmatprep.subr.mxu0 0.0
    %807 = vmatpush1.xpose.msra.mxu0 0.0
    %808 = vmatprep.subr.mxu0 0.0
    %809 = vmatpush1.xpose.msra.mxu0 0.0
    %810 = vmatprep.subr.mxu0 0.0
    %811 = vmatpush1.xpose.msra.mxu0 0.0
    %812 = vmatprep.subr.mxu0 0.0
    %813 = vmatpush1.xpose.msra.mxu0 0.0
    %814 = vmatprep.subr.mxu0 0.0
    %815 = vmatpush1.xpose.msra.mxu0 0.0
    %816 = vmatprep.subr.mxu0 0.0
    %817 = vmatpush1.xpose.msra.mxu0 0.0
    %818 = vmatprep.subr.mxu0 0.0
    %819 = vmatpush1.xpose.msra.mxu0 0.0
    %820 = vmatprep.subr.mxu0 0.0
    %821 = vmatpush1.xpose.msra.mxu0 0.0
    %822 = vmatprep.subr.mxu0 0.0
    %823 = vmatpush1.xpose.msra.mxu0 0.0
    %824 = vmatprep.subr.mxu0 0.0
    %825 = vmatpush1.xpose.msra.mxu0 0.0
    %826 = vmatprep.subr.mxu0 0.0
    %827 = vmatpush1.xpose.msra.mxu0 0.0
    %828 = vmatprep.subr.mxu0 0.0
    %829 = vmatpush1.xpose.msra.mxu0 0.0
    %830 = vmatprep.subr.mxu0 0.0
    %831 = vmatpush1.xpose.msra.mxu0 0.0
    %832 = vmatprep.mubr.f32.mxu0 0.0
    %833 = vmatmul.mubr.f32.gmra.mrb[0].mxu0 %v760
    %v834 = vpop.f32.mrb[0].mxu0
    %v835 = vadd.f32 0.0, %v834
    %v836 = vpop.f32.mrb[0].mxu0
    %837 = vmatprep.mubr.f32.mxu0 0.0
    %838 = vmatmul.mubr.f32.gmra.mrb[0].mxu0 %v762
    %v839 = vpop.f32.mrb[0].mxu0
    %v840 = vadd.f32 0.0, %v839
    %v841 = vpop.f32.mrb[0].mxu0
    %842 = vdwg.mxu0
    %v843 = vsel %vm180, %v835, -1e+30
    %v844 = vsel %vm181, %v840, -1e+30
    %v845 = vsel %vm276, %v843, -inf
    %846 = vmax.xlane.f32.xlu0 %v845
    %v847 = vpop.xlane.xlu0 %846
    %v848 = vsel %vm276, %v844, -inf
    %849 = vmax.xlane.f32.xlu0 %v848
    %v850 = vpop.xlane.xlu0 %849
    %v851 = vsub.f32 %v843, %v847
    %v852 = vsub.f32 %v844, %v850
    %v853 = vmul.f32 %v851, 1.442695
    %v854 = vpow.pop %v853
    %v855 = vmul.f32 %v852, 1.442695
    %v856 = vpow.pop %v855
    %v857 = vsel %vm276, %v854, 0.0
    %858 = vadd.xlane.f32.xlu0 %v857
    %v859 = vpop.xlane.xlu0 %858
    %v860 = vsel %vm276, %v856, 0.0
    %861 = vadd.xlane.f32.xlu0 %v860
    %v862 = vpop.xlane.xlu0 %861
    %v863 = vrcp.pop %v859
    %v864 = vrcp.pop %v862
    %v865 = vmul.f32 %v854, %v863
    %v866 = vmul.f32 %v856, %v864
    %867 = vrot.lane.b32.xlu0 %v158, 48
    %v868 = vpop.permute.xlu0 %867
    %869 = vrot.lane.b32.xlu0 %v163, 48
    %v870 = vpop.permute.xlu0 %869
    %v874 = vsel %vm276, %v865, 0
    %v877 = vsel %vm276, %v866, 0
    %879 = vmatprep.subr.mxu0 0.0
    %880 = vmatpush1.msra.mxu0 %v868
    %881 = vmatprep.subr.mxu0 0.0
    %882 = vmatpush1.msra.mxu0 %v870
    %883 = vmatprep.subr.mxu0 0.0
    %884 = vmatpush1.msra.mxu0 0.0
    %885 = vmatprep.subr.mxu0 0.0
    %886 = vmatpush1.msra.mxu0 0.0
    %887 = vmatprep.subr.mxu0 0.0
    %888 = vmatpush1.msra.mxu0 0.0
    %889 = vmatprep.subr.mxu0 0.0
    %890 = vmatpush1.msra.mxu0 0.0
    %891 = vmatprep.subr.mxu0 0.0
    %892 = vmatpush1.msra.mxu0 0.0
    %893 = vmatprep.subr.mxu0 0.0
    %894 = vmatpush1.msra.mxu0 0.0
    %895 = vmatprep.subr.mxu0 0.0
    %896 = vmatpush1.msra.mxu0 0.0
    %897 = vmatprep.subr.mxu0 0.0
    %898 = vmatpush1.msra.mxu0 0.0
    %899 = vmatprep.subr.mxu0 0.0
    %900 = vmatpush1.msra.mxu0 0.0
    %901 = vmatprep.subr.mxu0 0.0
    %902 = vmatpush1.msra.mxu0 0.0
    %903 = vmatprep.subr.mxu0 0.0
    %904 = vmatpush1.msra.mxu0 0.0
    %905 = vmatprep.subr.mxu0 0.0
    %906 = vmatpush1.msra.mxu0 0.0
    %907 = vmatprep.subr.mxu0 0.0
    %908 = vmatpush1.msra.mxu0 0.0
    %909 = vmatprep.subr.mxu0 0.0
    %910 = vmatpush1.msra.mxu0 0.0
    %911 = vmatprep.subr.mxu0 0.0
    %912 = vmatpush1.msra.mxu0 0.0
    %913 = vmatprep.subr.mxu0 0.0
    %914 = vmatpush1.msra.mxu0 0.0
    %915 = vmatprep.subr.mxu0 0.0
    %916 = vmatpush1.msra.mxu0 0.0
    %917 = vmatprep.subr.mxu0 0.0
    %918 = vmatpush1.msra.mxu0 0.0
    %919 = vmatprep.subr.mxu0 0.0
    %920 = vmatpush1.msra.mxu0 0.0
    %921 = vmatprep.subr.mxu0 0.0
    %922 = vmatpush1.msra.mxu0 0.0
    %923 = vmatprep.subr.mxu0 0.0
    %924 = vmatpush1.msra.mxu0 0.0
    %925 = vmatprep.subr.mxu0 0.0
    %926 = vmatpush1.msra.mxu0 0.0
    %927 = vmatprep.subr.mxu0 0.0
    %928 = vmatpush1.msra.mxu0 0.0
    %929 = vmatprep.subr.mxu0 0.0
    %930 = vmatpush1.msra.mxu0 0.0
    %931 = vmatprep.subr.mxu0 0.0
    %932 = vmatpush1.msra.mxu0 0.0
    %933 = vmatprep.subr.mxu0 0.0
    %934 = vmatpush1.msra.mxu0 0.0
    %935 = vmatprep.subr.mxu0 0.0
    %936 = vmatpush1.msra.mxu0 0.0
    %937 = vmatprep.subr.mxu0 0.0
    %938 = vmatpush1.msra.mxu0 0.0
    %939 = vmatprep.subr.mxu0 0.0
    %940 = vmatpush1.msra.mxu0 0.0
    %941 = vmatprep.subr.mxu0 0.0
    %942 = vmatpush1.msra.mxu0 0.0
    %943 = vmatprep.mubr.f32.mxu0 0.0
    %944 = vmatmul.mubr.f32.gmra.mrb[0].mxu0 %v874
    %v945 = vpop.f32.mrb[0].mxu0
    %v946 = vadd.f32 0.0, %v945
    %v947 = vpop.f32.mrb[0].mxu0
    %948 = vmatprep.mubr.f32.mxu0 0.0
    %949 = vmatmul.mubr.f32.gmra.mrb[0].mxu0 %v877
    %v950 = vpop.f32.mrb[0].mxu0
    %v951 = vadd.f32 0.0, %v950
    %v952 = vpop.f32.mrb[0].mxu0
    %953 = vdwg.mxu0
    %v954 = vld [vmem:[%s2 + $0x10] sm:$0xff]
    %v956 = vsel %vm188, %v946, 0
    %v959 = vsel %vm188, %v951, 0
    %961 = vmatprep.subr.mxu0 0.0
    %962 = vmatpush1.msra.mxu0 %v954
    %963 = vmatprep.subr.mxu0 0.0
    %964 = vmatpush1.msra.mxu0 0.0
    %965 = vmatprep.subr.mxu0 0.0
    %966 = vmatpush1.msra.mxu0 0.0
    %967 = vmatprep.subr.mxu0 0.0
    %968 = vmatpush1.msra.mxu0 0.0
    %969 = vmatprep.subr.mxu0 0.0
    %970 = vmatpush1.msra.mxu0 0.0
    %971 = vmatprep.subr.mxu0 0.0
    %972 = vmatpush1.msra.mxu0 0.0
    %973 = vmatprep.subr.mxu0 0.0
    %974 = vmatpush1.msra.mxu0 0.0
    %975 = vmatprep.subr.mxu0 0.0
    %976 = vmatpush1.msra.mxu0 0.0
    %977 = vmatprep.subr.mxu0 0.0
    %978 = vmatpush1.msra.mxu0 0.0
    %979 = vmatprep.subr.mxu0 0.0
    %980 = vmatpush1.msra.mxu0 0.0
    %981 = vmatprep.subr.mxu0 0.0
    %982 = vmatpush1.msra.mxu0 0.0
    %983 = vmatprep.subr.mxu0 0.0
    %984 = vmatpush1.msra.mxu0 0.0
    %985 = vmatprep.subr.mxu0 0.0
    %986 = vmatpush1.msra.mxu0 0.0
    %987 = vmatprep.subr.mxu0 0.0
    %988 = vmatpush1.msra.mxu0 0.0
    %989 = vmatprep.subr.mxu0 0.0
    %990 = vmatpush1.msra.mxu0 0.0
    %991 = vmatprep.subr.mxu0 0.0
    %992 = vmatpush1.msra.mxu0 0.0
    %993 = vmatprep.subr.mxu0 0.0
    %994 = vmatpush1.msra.mxu0 0.0
    %995 = vmatprep.subr.mxu0 0.0
    %996 = vmatpush1.msra.mxu0 0.0
    %997 = vmatprep.subr.mxu0 0.0
    %998 = vmatpush1.msra.mxu0 0.0
    %999 = vmatprep.subr.mxu0 0.0
    %1000 = vmatpush1.msra.mxu0 0.0
    %1001 = vmatprep.subr.mxu0 0.0
    %1002 = vmatpush1.msra.mxu0 0.0
    %1003 = vmatprep.subr.mxu0 0.0
    %1004 = vmatpush1.msra.mxu0 0.0
    %1005 = vmatprep.subr.mxu0 0.0
    %1006 = vmatpush1.msra.mxu0 0.0
    %1007 = vmatprep.subr.mxu0 0.0
    %1008 = vmatpush1.msra.mxu0 0.0
    %1009 = vmatprep.subr.mxu0 0.0
    %1010 = vmatpush1.msra.mxu0 0.0
    %1011 = vmatprep.subr.mxu0 0.0
    %1012 = vmatpush1.msra.mxu0 0.0
    %1013 = vmatprep.subr.mxu0 0.0
    %1014 = vmatpush1.msra.mxu0 0.0
    %1015 = vmatprep.subr.mxu0 0.0
    %1016 = vmatpush1.msra.mxu0 0.0
    %1017 = vmatprep.subr.mxu0 0.0
    %1018 = vmatpush1.msra.mxu0 0.0
    %1019 = vmatprep.subr.mxu0 0.0
    %1020 = vmatpush1.msra.mxu0 0.0
    %1021 = vmatprep.subr.mxu0 0.0
    %1022 = vmatpush1.msra.mxu0 0.0
    %1023 = vmatprep.subr.mxu0 0.0
    %1024 = vmatpush1.msra.mxu0 0.0
    %1025 = vmatprep.mubr.f32.mxu0 0.0
    %1026 = vmatmul.mubr.f32.gmra.mrb[0].mxu0 %v956
    %v1027 = vpop.f32.mrb[0].mxu0
    %v1028 = vadd.f32 0.0, %v1027
    %v1029 = vpop.f32.mrb[0].mxu0
    %1030 = vmatprep.mubr.f32.mxu0 0.0
    %1031 = vmatmul.mubr.f32.gmra.mrb[0].mxu0 %v959
    %v1032 = vpop.f32.mrb[0].mxu0
    %v1033 = vadd.f32 0.0, %v1032
    %v1034 = vpop.f32.mrb[0].mxu0
    %1035 = vdwg.mxu0
    %v1036 = vadd.f32 %v744, %v1028
    %v1037 = vadd.f32 %v749, %v1033
    %1038 = vrot.lane.b32.xlu0 %v166, 104
    %v1039 = vpop.permute.xlu0 %1038
    %1040 = vrot.lane.b32.xlu0 %v167, 104
    %v1041 = vpop.permute.xlu0 %1040
    %1042 = vrot.lane.b32.xlu0 %v158, 72
    %v1043 = vpop.permute.xlu0 %1042
    %1044 = vrot.lane.b32.xlu0 %v163, 72
    %v1045 = vpop.permute.xlu0 %1044
    %v1046 = vsel %vm188, %v1039, 0
    %v1048 = vsel %vm188, %v1041, 0
    %v1050 = vsel %vm188, %v1043, 0
    %v1052 = vsel %vm188, %v1045, 0
    %1054 = vmatprep.subr.mxu0 0.0
    %1055 = vmatpush1.xpose.msra.mxu0 %v1050
    %1056 = vmatprep.subr.mxu0 0.0
    %1057 = vmatpush1.xpose.msra.mxu0 %v1052
    %1058 = vmatprep.subr.mxu0 0.0
    %1059 = vmatpush1.xpose.msra.mxu0 0.0
    %1060 = vmatprep.subr.mxu0 0.0
    %1061 = vmatpush1.xpose.msra.mxu0 0.0
    %1062 = vmatprep.subr.mxu0 0.0
    %1063 = vmatpush1.xpose.msra.mxu0 0.0
    %1064 = vmatprep.subr.mxu0 0.0
    %1065 = vmatpush1.xpose.msra.mxu0 0.0
    %1066 = vmatprep.subr.mxu0 0.0
    %1067 = vmatpush1.xpose.msra.mxu0 0.0
    %1068 = vmatprep.subr.mxu0 0.0
    %1069 = vmatpush1.xpose.msra.mxu0 0.0
    %1070 = vmatprep.subr.mxu0 0.0
    %1071 = vmatpush1.xpose.msra.mxu0 0.0
    %1072 = vmatprep.subr.mxu0 0.0
    %1073 = vmatpush1.xpose.msra.mxu0 0.0
    %1074 = vmatprep.subr.mxu0 0.0
    %1075 = vmatpush1.xpose.msra.mxu0 0.0
    %1076 = vmatprep.subr.mxu0 0.0
    %1077 = vmatpush1.xpose.msra.mxu0 0.0
    %1078 = vmatprep.subr.mxu0 0.0
    %1079 = vmatpush1.xpose.msra.mxu0 0.0
    %1080 = vmatprep.subr.mxu0 0.0
    %1081 = vmatpush1.xpose.msra.mxu0 0.0
    %1082 = vmatprep.subr.mxu0 0.0
    %1083 = vmatpush1.xpose.msra.mxu0 0.0
    %1084 = vmatprep.subr.mxu0 0.0
    %1085 = vmatpush1.xpose.msra.mxu0 0.0
    %1086 = vmatprep.subr.mxu0 0.0
    %1087 = vmatpush1.xpose.msra.mxu0 0.0
    %1088 = vmatprep.subr.mxu0 0.0
    %1089 = vmatpush1.xpose.msra.mxu0 0.0
    %1090 = vmatprep.subr.mxu0 0.0
    %1091 = vmatpush1.xpose.msra.mxu0 0.0
    %1092 = vmatprep.subr.mxu0 0.0
    %1093 = vmatpush1.xpose.msra.mxu0 0.0
    %1094 = vmatprep.subr.mxu0 0.0
    %1095 = vmatpush1.xpose.msra.mxu0 0.0
    %1096 = vmatprep.subr.mxu0 0.0
    %1097 = vmatpush1.xpose.msra.mxu0 0.0
    %1098 = vmatprep.subr.mxu0 0.0
    %1099 = vmatpush1.xpose.msra.mxu0 0.0
    %1100 = vmatprep.subr.mxu0 0.0
    %1101 = vmatpush1.xpose.msra.mxu0 0.0
    %1102 = vmatprep.subr.mxu0 0.0
    %1103 = vmatpush1.xpose.msra.mxu0 0.0
    %1104 = vmatprep.subr.mxu0 0.0
    %1105 = vmatpush1.xpose.msra.mxu0 0.0
    %1106 = vmatprep.subr.mxu0 0.0
    %1107 = vmatpush1.xpose.msra.mxu0 0.0
    %1108 = vmatprep.subr.mxu0 0.0
    %1109 = vmatpush1.xpose.msra.mxu0 0.0
    %1110 = vmatprep.subr.mxu0 0.0
    %1111 = vmatpush1.xpose.msra.mxu0 0.0
    %1112 = vmatprep.subr.mxu0 0.0
    %1113 = vmatpush1.xpose.msra.mxu0 0.0
    %1114 = vmatprep.subr.mxu0 0.0
    %1115 = vmatpush1.xpose.msra.mxu0 0.0
    %1116 = vmatprep.subr.mxu0 0.0
    %1117 = vmatpush1.xpose.msra.mxu0 0.0
    %1118 = vmatprep.mubr.f32.mxu0 0.0
    %1119 = vmatmul.mubr.f32.gmra.mrb[0].mxu0 %v1046
    %v1120 = vpop.f32.mrb[0].mxu0
    %v1121 = vadd.f32 0.0, %v1120
    %v1122 = vpop.f32.mrb[0].mxu0
    %1123 = vmatprep.mubr.f32.mxu0 0.0
    %1124 = vmatmul.mubr.f32.gmra.mrb[0].mxu0 %v1048
    %v1125 = vpop.f32.mrb[0].mxu0
    %v1126 = vadd.f32 0.0, %v1125
    %v1127 = vpop.f32.mrb[0].mxu0
    %1128 = vdwg.mxu0
    %v1129 = vsel %vm180, %v1121, -1e+30
    %v1130 = vsel %vm181, %v1126, -1e+30
    %v1131 = vsel %vm276, %v1129, -inf
    %1132 = vmax.xlane.f32.xlu0 %v1131
    %v1133 = vpop.xlane.xlu0 %1132
    %v1134 = vsel %vm276, %v1130, -inf
    %1135 = vmax.xlane.f32.xlu0 %v1134
    %v1136 = vpop.xlane.xlu0 %1135
    %v1137 = vsub.f32 %v1129, %v1133
    %v1138 = vsub.f32 %v1130, %v1136
    %v1139 = vmul.f32 %v1137, 1.442695
    %v1140 = vpow.pop %v1139
    %v1141 = vmul.f32 %v1138, 1.442695
    %v1142 = vpow.pop %v1141
    %v1143 = vsel %vm276, %v1140, 0.0
    %1144 = vadd.xlane.f32.xlu0 %v1143
    %v1145 = vpop.xlane.xlu0 %1144
    %v1146 = vsel %vm276, %v1142, 0.0
    %1147 = vadd.xlane.f32.xlu0 %v1146
    %v1148 = vpop.xlane.xlu0 %1147
    %v1149 = vrcp.pop %v1145
    %v1150 = vrcp.pop %v1148
    %v1151 = vmul.f32 %v1140, %v1149
    %v1152 = vmul.f32 %v1142, %v1150
    %1153 = vrot.lane.b32.xlu0 %v158, 40
    %v1154 = vpop.permute.xlu0 %1153
    %1155 = vrot.lane.b32.xlu0 %v163, 40
    %v1156 = vpop.permute.xlu0 %1155
    %v1160 = vsel %vm276, %v1151, 0
    %v1163 = vsel %vm276, %v1152, 0
    %1165 = vmatprep.subr.mxu0 0.0
    %1166 = vmatpush1.msra.mxu0 %v1154
    %1167 = vmatprep.subr.mxu0 0.0
    %1168 = vmatpush1.msra.mxu0 %v1156
    %1169 = vmatprep.subr.mxu0 0.0
    %1170 = vmatpush1.msra.mxu0 0.0
    %1171 = vmatprep.subr.mxu0 0.0
    %1172 = vmatpush1.msra.mxu0 0.0
    %1173 = vmatprep.subr.mxu0 0.0
    %1174 = vmatpush1.msra.mxu0 0.0
    %1175 = vmatprep.subr.mxu0 0.0
    %1176 = vmatpush1.msra.mxu0 0.0
    %1177 = vmatprep.subr.mxu0 0.0
    %1178 = vmatpush1.msra.mxu0 0.0
    %1179 = vmatprep.subr.mxu0 0.0
    %1180 = vmatpush1.msra.mxu0 0.0
    %1181 = vmatprep.subr.mxu0 0.0
    %1182 = vmatpush1.msra.mxu0 0.0
    %1183 = vmatprep.subr.mxu0 0.0
    %1184 = vmatpush1.msra.mxu0 0.0
    %1185 = vmatprep.subr.mxu0 0.0
    %1186 = vmatpush1.msra.mxu0 0.0
    %1187 = vmatprep.subr.mxu0 0.0
    %1188 = vmatpush1.msra.mxu0 0.0
    %1189 = vmatprep.subr.mxu0 0.0
    %1190 = vmatpush1.msra.mxu0 0.0
    %1191 = vmatprep.subr.mxu0 0.0
    %1192 = vmatpush1.msra.mxu0 0.0
    %1193 = vmatprep.subr.mxu0 0.0
    %1194 = vmatpush1.msra.mxu0 0.0
    %1195 = vmatprep.subr.mxu0 0.0
    %1196 = vmatpush1.msra.mxu0 0.0
    %1197 = vmatprep.subr.mxu0 0.0
    %1198 = vmatpush1.msra.mxu0 0.0
    %1199 = vmatprep.subr.mxu0 0.0
    %1200 = vmatpush1.msra.mxu0 0.0
    %1201 = vmatprep.subr.mxu0 0.0
    %1202 = vmatpush1.msra.mxu0 0.0
    %1203 = vmatprep.subr.mxu0 0.0
    %1204 = vmatpush1.msra.mxu0 0.0
    %1205 = vmatprep.subr.mxu0 0.0
    %1206 = vmatpush1.msra.mxu0 0.0
    %1207 = vmatprep.subr.mxu0 0.0
    %1208 = vmatpush1.msra.mxu0 0.0
    %1209 = vmatprep.subr.mxu0 0.0
    %1210 = vmatpush1.msra.mxu0 0.0
    %1211 = vmatprep.subr.mxu0 0.0
    %1212 = vmatpush1.msra.mxu0 0.0
    %1213 = vmatprep.subr.mxu0 0.0
    %1214 = vmatpush1.msra.mxu0 0.0
    %1215 = vmatprep.subr.mxu0 0.0
    %1216 = vmatpush1.msra.mxu0 0.0
    %1217 = vmatprep.subr.mxu0 0.0
    %1218 = vmatpush1.msra.mxu0 0.0
    %1219 = vmatprep.subr.mxu0 0.0
    %1220 = vmatpush1.msra.mxu0 0.0
    %1221 = vmatprep.subr.mxu0 0.0
    %1222 = vmatpush1.msra.mxu0 0.0
    %1223 = vmatprep.subr.mxu0 0.0
    %1224 = vmatpush1.msra.mxu0 0.0
    %1225 = vmatprep.subr.mxu0 0.0
    %1226 = vmatpush1.msra.mxu0 0.0
    %1227 = vmatprep.subr.mxu0 0.0
    %1228 = vmatpush1.msra.mxu0 0.0
    %1229 = vmatprep.mubr.f32.mxu0 0.0
    %1230 = vmatmul.mubr.f32.gmra.mrb[0].mxu0 %v1160
    %v1231 = vpop.f32.mrb[0].mxu0
    %v1232 = vadd.f32 0.0, %v1231
    %v1233 = vpop.f32.mrb[0].mxu0
    %1234 = vmatprep.mubr.f32.mxu0 0.0
    %1235 = vmatmul.mubr.f32.gmra.mrb[0].mxu0 %v1163
    %v1236 = vpop.f32.mrb[0].mxu0
    %v1237 = vadd.f32 0.0, %v1236
    %v1238 = vpop.f32.mrb[0].mxu0
    %1239 = vdwg.mxu0
    %v1240 = vld [vmem:[%s2 + $0x18] sm:$0xff]
    %v1242 = vsel %vm188, %v1232, 0
    %v1245 = vsel %vm188, %v1237, 0
    %1247 = vmatprep.subr.mxu0 0.0
    %1248 = vmatpush1.msra.mxu0 %v1240
    %1249 = vmatprep.subr.mxu0 0.0
    %1250 = vmatpush1.msra.mxu0 0.0
    %1251 = vmatprep.subr.mxu0 0.0
    %1252 = vmatpush1.msra.mxu0 0.0
    %1253 = vmatprep.subr.mxu0 0.0
    %1254 = vmatpush1.msra.mxu0 0.0
    %1255 = vmatprep.subr.mxu0 0.0
    %1256 = vmatpush1.msra.mxu0 0.0
    %1257 = vmatprep.subr.mxu0 0.0
    %1258 = vmatpush1.msra.mxu0 0.0
    %1259 = vmatprep.subr.mxu0 0.0
    %1260 = vmatpush1.msra.mxu0 0.0
    %1261 = vmatprep.subr.mxu0 0.0
    %1262 = vmatpush1.msra.mxu0 0.0
    %1263 = vmatprep.subr.mxu0 0.0
    %1264 = vmatpush1.msra.mxu0 0.0
    %1265 = vmatprep.subr.mxu0 0.0
    %1266 = vmatpush1.msra.mxu0 0.0
    %1267 = vmatprep.subr.mxu0 0.0
    %1268 = vmatpush1.msra.mxu0 0.0
    %1269 = vmatprep.subr.mxu0 0.0
    %1270 = vmatpush1.msra.mxu0 0.0
    %1271 = vmatprep.subr.mxu0 0.0
    %1272 = vmatpush1.msra.mxu0 0.0
    %1273 = vmatprep.subr.mxu0 0.0
    %1274 = vmatpush1.msra.mxu0 0.0
    %1275 = vmatprep.subr.mxu0 0.0
    %1276 = vmatpush1.msra.mxu0 0.0
    %1277 = vmatprep.subr.mxu0 0.0
    %1278 = vmatpush1.msra.mxu0 0.0
    %1279 = vmatprep.subr.mxu0 0.0
    %1280 = vmatpush1.msra.mxu0 0.0
    %1281 = vmatprep.subr.mxu0 0.0
    %1282 = vmatpush1.msra.mxu0 0.0
    %1283 = vmatprep.subr.mxu0 0.0
    %1284 = vmatpush1.msra.mxu0 0.0
    %1285 = vmatprep.subr.mxu0 0.0
    %1286 = vmatpush1.msra.mxu0 0.0
    %1287 = vmatprep.subr.mxu0 0.0
    %1288 = vmatpush1.msra.mxu0 0.0
    %1289 = vmatprep.subr.mxu0 0.0
    %1290 = vmatpush1.msra.mxu0 0.0
    %1291 = vmatprep.subr.mxu0 0.0
    %1292 = vmatpush1.msra.mxu0 0.0
    %1293 = vmatprep.subr.mxu0 0.0
    %1294 = vmatpush1.msra.mxu0 0.0
    %1295 = vmatprep.subr.mxu0 0.0
    %1296 = vmatpush1.msra.mxu0 0.0
    %1297 = vmatprep.subr.mxu0 0.0
    %1298 = vmatpush1.msra.mxu0 0.0
    %1299 = vmatprep.subr.mxu0 0.0
    %1300 = vmatpush1.msra.mxu0 0.0
    %1301 = vmatprep.subr.mxu0 0.0
    %1302 = vmatpush1.msra.mxu0 0.0
    %1303 = vmatprep.subr.mxu0 0.0
    %1304 = vmatpush1.msra.mxu0 0.0
    %1305 = vmatprep.subr.mxu0 0.0
    %1306 = vmatpush1.msra.mxu0 0.0
    %1307 = vmatprep.subr.mxu0 0.0
    %1308 = vmatpush1.msra.mxu0 0.0
    %1309 = vmatprep.subr.mxu0 0.0
    %1310 = vmatpush1.msra.mxu0 0.0
    %1311 = vmatprep.mubr.f32.mxu0 0.0
    %1312 = vmatmul.mubr.f32.gmra.mrb[0].mxu0 %v1242
    %v1313 = vpop.f32.mrb[0].mxu0
    %v1314 = vadd.f32 0.0, %v1313
    %v1315 = vpop.f32.mrb[0].mxu0
    %1316 = vmatprep.mubr.f32.mxu0 0.0
    %1317 = vmatmul.mubr.f32.gmra.mrb[0].mxu0 %v1245
    %v1318 = vpop.f32.mrb[0].mxu0
    %v1319 = vadd.f32 0.0, %v1318
    %v1320 = vpop.f32.mrb[0].mxu0
    %1321 = vdwg.mxu0
    %v1322 = vadd.f32 %v1036, %v1314
    %v1323 = vadd.f32 %v1037, %v1319
    %v1324 = vadd.f32 %v27, %v1322
    %v1325 = vadd.f32 %v28, %v1323
    %v1326 = vlaneseq
    %v1327 = vshrl.u32 %v1326, 7
    %v1328 = vsub.s32 0, %v1327
    %v1329 = vrot.slane %v33, %v1328
    %v1330 = vadd.f32 %v1324, %v1329
    %v1331 = vadd.f32 %v1325, %v1329
    %v1332 = vsel %vm37, %v1330, 0.0
    %1333 = vadd.xlane.f32.xlu0 %v1332
    %v1334 = vpop.xlane.xlu0 %1333
    %v1335 = vsel %vm37, %v1331, 0.0
    %1336 = vadd.xlane.f32.xlu0 %v1335
    %v1337 = vpop.xlane.xlu0 %1336
    %v1338 = vmul.f32 %v1334, %v44
    %v1339 = vmul.f32 %v1337, %v44
    %v1340 = vsub.f32 %v1330, %v1338
    %v1341 = vsub.f32 %v1331, %v1339
    %v1342 = vmul.f32 %v1340, %v1340
    %v1343 = vmul.f32 %v1341, %v1341
    %v1344 = vsel %vm37, %v1342, 0.0
    %1345 = vadd.xlane.f32.xlu0 %v1344
    %v1346 = vpop.xlane.xlu0 %1345
    %v1347 = vsel %vm37, %v1343, 0.0
    %1348 = vadd.xlane.f32.xlu0 %v1347
    %v1349 = vpop.xlane.xlu0 %1348
    %v1350 = vmul.f32 %v1346, %v44
    %v1351 = vmul.f32 %v1349, %v44
    %v1352 = vadd.f32 %v1350, 1e-05
    %v1353 = vadd.f32 %v1351, 1e-05
    %v1354 = vrsqrt.pop %v1352
    %v1355 = vrsqrt.pop %v1353
    %v1356 = vmul.f32 %v1340, %v1354
    %v1357 = vmul.f32 %v1341, %v1355
    %v1358 = vlaneseq
    %v1359 = vshrl.u32 %v1358, 7
    %v1360 = vsub.s32 0, %v1359
    %v1361 = vrot.slane %v31, %v1360
    %v1362 = vmul.f32 %v1356, %v1361
    %v1363 = vmul.f32 %v1357, %v1361
    %v1364 = vlaneseq
    %v1365 = vshrl.u32 %v1364, 7
    %v1366 = vsub.s32 0, %v1365
    %v1367 = vrot.slane %v32, %v1366
    %v1368 = vadd.f32 %v1362, %v1367
    %v1369 = vadd.f32 %v1363, %v1367
    %v1370 = vld [vmem:[%s3] sm:$0xff]
    %v1371 = vld [vmem:[%s3 + $0x8] sm:$0xff]
    %v1372 = vld [vmem:[%s3 + $0x10] sm:$0xff]
    %v1373 = vld [vmem:[%s3 + $0x18] sm:$0xff]
    %v1374 = vlaneseq
    %v1375 = vshrl.u32 %v1374, 7
    %v1376 = vsub.s32 0, %v1375
    %v1377 = vrot.slane %v35, %v1376
    %v1379 = vsel %vm37, %v1368, 0
    %v1382 = vsel %vm37, %v1369, 0
    %1384 = vmatprep.subr.mxu0 0.0
    %1385 = vmatpush1.msra.mxu0 %v1370
    %1386 = vmatprep.subr.mxu0 0.0
    %1387 = vmatpush1.msra.mxu0 %v1371
    %1388 = vmatprep.subr.mxu0 0.0
    %1389 = vmatpush1.msra.mxu0 %v1372
    %1390 = vmatprep.subr.mxu0 0.0
    %1391 = vmatpush1.msra.mxu0 %v1373
    %1392 = vmatprep.subr.mxu0 0.0
    %1393 = vmatpush1.msra.mxu0 0.0
    %1394 = vmatprep.subr.mxu0 0.0
    %1395 = vmatpush1.msra.mxu0 0.0
    %1396 = vmatprep.subr.mxu0 0.0
    %1397 = vmatpush1.msra.mxu0 0.0
    %1398 = vmatprep.subr.mxu0 0.0
    %1399 = vmatpush1.msra.mxu0 0.0
    %1400 = vmatprep.subr.mxu0 0.0
    %1401 = vmatpush1.msra.mxu0 0.0
    %1402 = vmatprep.subr.mxu0 0.0
    %1403 = vmatpush1.msra.mxu0 0.0
    %1404 = vmatprep.subr.mxu0 0.0
    %1405 = vmatpush1.msra.mxu0 0.0
    %1406 = vmatprep.subr.mxu0 0.0
    %1407 = vmatpush1.msra.mxu0 0.0
    %1408 = vmatprep.subr.mxu0 0.0
    %1409 = vmatpush1.msra.mxu0 0.0
    %1410 = vmatprep.subr.mxu0 0.0
    %1411 = vmatpush1.msra.mxu0 0.0
    %1412 = vmatprep.subr.mxu0 0.0
    %1413 = vmatpush1.msra.mxu0 0.0
    %1414 = vmatprep.subr.mxu0 0.0
    %1415 = vmatpush1.msra.mxu0 0.0
    %1416 = vmatprep.subr.mxu0 0.0
    %1417 = vmatpush1.msra.mxu0 0.0
    %1418 = vmatprep.subr.mxu0 0.0
    %1419 = vmatpush1.msra.mxu0 0.0
    %1420 = vmatprep.subr.mxu0 0.0
    %1421 = vmatpush1.msra.mxu0 0.0
    %1422 = vmatprep.subr.mxu0 0.0
    %1423 = vmatpush1.msra.mxu0 0.0
    %1424 = vmatprep.subr.mxu0 0.0
    %1425 = vmatpush1.msra.mxu0 0.0
    %1426 = vmatprep.subr.mxu0 0.0
    %1427 = vmatpush1.msra.mxu0 0.0
    %1428 = vmatprep.subr.mxu0 0.0
    %1429 = vmatpush1.msra.mxu0 0.0
    %1430 = vmatprep.subr.mxu0 0.0
    %1431 = vmatpush1.msra.mxu0 0.0
    %1432 = vmatprep.subr.mxu0 0.0
    %1433 = vmatpush1.msra.mxu0 0.0
    %1434 = vmatprep.subr.mxu0 0.0
    %1435 = vmatpush1.msra.mxu0 0.0
    %1436 = vmatprep.subr.mxu0 0.0
    %1437 = vmatpush1.msra.mxu0 0.0
    %1438 = vmatprep.subr.mxu0 0.0
    %1439 = vmatpush1.msra.mxu0 0.0
    %1440 = vmatprep.subr.mxu0 0.0
    %1441 = vmatpush1.msra.mxu0 0.0
    %1442 = vmatprep.subr.mxu0 0.0
    %1443 = vmatpush1.msra.mxu0 0.0
    %1444 = vmatprep.subr.mxu0 0.0
    %1445 = vmatpush1.msra.mxu0 0.0
    %1446 = vmatprep.subr.mxu0 0.0
    %1447 = vmatpush1.msra.mxu0 0.0
    %1448 = vmatprep.mubr.f32.mxu0 0.0
    %1449 = vmatmul.mubr.f32.gmra.mrb[0].mxu0 %v1379
    %v1450 = vpop.f32.mrb[0].mxu0
    %v1451 = vadd.f32 %v1377, %v1450
    %v1452 = vpop.f32.mrb[0].mxu0
    %1453 = vmatprep.mubr.f32.mxu0 0.0
    %1454 = vmatmul.mubr.f32.gmra.mrb[0].mxu0 %v1382
    %v1455 = vpop.f32.mrb[0].mxu0
    %v1456 = vadd.f32 %v1377, %v1455
    %v1457 = vpop.f32.mrb[0].mxu0
    %1458 = vdwg.mxu0
    %v1459 = vmul.f32 %v1451, 1.702
    %v1460 = vmul.f32 %v1456, 1.702
    %v1461 = vxor.u32 %v1459, 2147483648
    %v1462 = vxor.u32 %v1460, 2147483648
    %v1463 = vmul.f32 %v1461, 1.442695
    %v1464 = vpow.pop %v1463
    %v1465 = vmul.f32 %v1462, 1.442695
    %v1466 = vpow.pop %v1465
    %v1467 = vadd.f32 %v1464, 1.0
    %v1468 = vadd.f32 %v1466, 1.0
    %v1469 = vrcp.pop %v1467
    %v1470 = vmul.f32 1.0, %v1469
    %v1471 = vrcp.pop %v1468
    %v1472 = vmul.f32 1.0, %v1471
    %v1473 = vmul.f32 %v1451, %v1470
    %v1474 = vmul.f32 %v1456, %v1472
    %v1475 = vld [vmem:[%s4] sm:$0xff]
    %v1476 = vld [vmem:[%s4 + $0x8] sm:$0xff]
    %v1477 = vld [vmem:[%s4 + $0x10] sm:$0xff]
    %v1478 = vld [vmem:[%s4 + $0x18] sm:$0xff]
    %v1479 = vld [vmem:[%s4 + $0x20] sm:$0xff]
    %v1480 = vld [vmem:[%s4 + $0x28] sm:$0xff]
    %v1481 = vld [vmem:[%s4 + $0x30] sm:$0xff]
    %v1482 = vld [vmem:[%s4 + $0x38] sm:$0xff]
    %v1483 = vld [vmem:[%s4 + $0x40] sm:$0xff]
    %v1484 = vld [vmem:[%s4 + $0x48] sm:$0xff]
    %v1485 = vld [vmem:[%s4 + $0x50] sm:$0xff]
    %v1486 = vld [vmem:[%s4 + $0x58] sm:$0xff]
    %v1487 = vld [vmem:[%s4 + $0x60] sm:$0xff]
    %v1488 = vld [vmem:[%s4 + $0x68] sm:$0xff]
    %v1489 = vld [vmem:[%s4 + $0x70] sm:$0xff]
    %v1490 = vld [vmem:[%s4 + $0x78] sm:$0xff]
    %v1491 = vlaneseq
    %v1492 = vshrl.u32 %v1491, 7
    %v1493 = vsub.s32 0, %v1492
    %v1494 = vrot.slane %v34, %v1493
    %1495 = vmatprep.subr.mxu0 0.0
    %1496 = vmatpush1.msra.mxu0 %v1475
    %1497 = vmatprep.subr.mxu0 0.0
    %1498 = vmatpush1.msra.mxu0 %v1476
    %1499 = vmatprep.subr.mxu0 0.0
    %1500 = vmatpush1.msra.mxu0 %v1477
    %1501 = vmatprep.subr.mxu0 0.0
    %1502 = vmatpush1.msra.mxu0 %v1478
    %1503 = vmatprep.subr.mxu0 0.0
    %1504 = vmatpush1.msra.mxu0 %v1479
    %1505 = vmatprep.subr.mxu0 0.0
    %1506 = vmatpush1.msra.mxu0 %v1480
    %1507 = vmatprep.subr.mxu0 0.0
    %1508 = vmatpush1.msra.mxu0 %v1481
    %1509 = vmatprep.subr.mxu0 0.0
    %1510 = vmatpush1.msra.mxu0 %v1482
    %1511 = vmatprep.subr.mxu0 0.0
    %1512 = vmatpush1.msra.mxu0 %v1483
    %1513 = vmatprep.subr.mxu0 0.0
    %1514 = vmatpush1.msra.mxu0 %v1484
    %1515 = vmatprep.subr.mxu0 0.0
    %1516 = vmatpush1.msra.mxu0 %v1485
    %1517 = vmatprep.subr.mxu0 0.0
    %1518 = vmatpush1.msra.mxu0 %v1486
    %1519 = vmatprep.subr.mxu0 0.0
    %1520 = vmatpush1.msra.mxu0 %v1487
    %1521 = vmatprep.subr.mxu0 0.0
    %1522 = vmatpush1.msra.mxu0 %v1488
    %1523 = vmatprep.subr.mxu0 0.0
    %1524 = vmatpush1.msra.mxu0 %v1489
    %1525 = vmatprep.subr.mxu0 0.0
    %1526 = vmatpush1.msra.mxu0 %v1490
    %1527 = vmatprep.subr.mxu0 0.0
    %1528 = vmatpush1.msra.mxu0 0.0
    %1529 = vmatprep.subr.mxu0 0.0
    %1530 = vmatpush1.msra.mxu0 0.0
    %1531 = vmatprep.subr.mxu0 0.0
    %1532 = vmatpush1.msra.mxu0 0.0
    %1533 = vmatprep.subr.mxu0 0.0
    %1534 = vmatpush1.msra.mxu0 0.0
    %1535 = vmatprep.subr.mxu0 0.0
    %1536 = vmatpush1.msra.mxu0 0.0
    %1537 = vmatprep.subr.mxu0 0.0
    %1538 = vmatpush1.msra.mxu0 0.0
    %1539 = vmatprep.subr.mxu0 0.0
    %1540 = vmatpush1.msra.mxu0 0.0
    %1541 = vmatprep.subr.mxu0 0.0
    %1542 = vmatpush1.msra.mxu0 0.0
    %1543 = vmatprep.subr.mxu0 0.0
    %1544 = vmatpush1.msra.mxu0 0.0
    %1545 = vmatprep.subr.mxu0 0.0
    %1546 = vmatpush1.msra.mxu0 0.0
    %1547 = vmatprep.subr.mxu0 0.0
    %1548 = vmatpush1.msra.mxu0 0.0
    %1549 = vmatprep.subr.mxu0 0.0
    %1550 = vmatpush1.msra.mxu0 0.0
    %1551 = vmatprep.subr.mxu0 0.0
    %1552 = vmatpush1.msra.mxu0 0.0
    %1553 = vmatprep.subr.mxu0 0.0
    %1554 = vmatpush1.msra.mxu0 0.0
    %1555 = vmatprep.subr.mxu0 0.0
    %1556 = vmatpush1.msra.mxu0 0.0
    %1557 = vmatprep.subr.mxu0 0.0
    %1558 = vmatpush1.msra.mxu0 0.0
    %1559 = vmatprep.mubr.f32.mxu0 0.0
    %1560 = vmatmul.mubr.f32.gmra.mrb[0].mxu0 %v1473
    %v1561 = vpop.f32.mrb[0].mxu0
    %v1562 = vadd.f32 %v1494, %v1561
    %v1563 = vpop.f32.mrb[0].mxu0
    %1564 = vmatprep.mubr.f32.mxu0 0.0
    %1565 = vmatmul.mubr.f32.gmra.mrb[0].mxu0 %v1474
    %v1566 = vpop.f32.mrb[0].mxu0
    %v1567 = vadd.f32 %v1494, %v1566
    %v1568 = vpop.f32.mrb[0].mxu0
    %1569 = vdwg.mxu0
    %v1570 = vadd.f32 %v1330, %v1562
    %v1571 = vadd.f32 %v1331, %v1567
    %1572 = vst.msk [vmem:[#allocation2] sm:$0xff] %vm37, %v1570
    %1573 = vst.msk [vmem:[#allocation2 + $0x8] sm:$0xff] %vm37, %v1571
    // Predicated region
    $region30: #{tpu_custom_call.1} parent=1 // pred_check
      _
    $region31: #{tpu_custom_call.1} parent=1 // pred_check_branch
      %1575 = sbr.rel (0) target = $region33
    $region32: #{tpu_custom_call.1} parent=1 // pred_region
      %s1577 = ssub.s32 256, 256
      %1578 = vsyncadd [#allocation3], %s1577
      %s1579 = sshll.u32 [#allocation2], 4
      %s1580 = int_to_ptr.vmem [resolvable:$true] %s1579
      %1585 = dma.vmem_to_hbm [thread:$0]  %s1580, 256, %s7, [#allocation3], 128, 128, 8
    $region33: #{tpu_custom_call.1} parent=1 // pred_fallthru
      _
    // Predicated region
    $region34: #{tpu_custom_call.1} parent=1 // pred_check
      _
    $region35: #{tpu_custom_call.1} parent=1 // pred_check_branch
      %1587 = sbr.rel (0) target = $region37
    $region36: #{tpu_custom_call.1} parent=1 // pred_region
      %1588 = dma.done [#allocation3], 256
    $region37: #{tpu_custom_call.1} parent=1 // pred_fallthru
      _
    %1589 = vsyncpa [#allocation3], 1

</llo_original>
